<compile_context>
chip_gen: v5e
topology: v5e:2x2
jax: 0.10.0
libtpu: 0.0.40
codegen_flags: <defaults>
</compile_context>

<pallas_src>
import jax
import jax.numpy as jnp
from jax.experimental import pallas as pl
from jax.experimental.pallas import tpu as pltpu

# ---------------- configuration (small synthetic shapes) ----------------
IMG_H, IMG_W = 32, 32
IMG_HW = IMG_H * IMG_W                       # 1024 (lane-dense output width)
FEAT_CHANNELS = 8
STRIDES = (4, 8, 16)                         # -> feature maps 8x8, 4x4, 2x2
NUM_LEVELS = len(STRIDES)
NUM_ANCHORS = 2
NUM_CLASSES = 4                              # foreground classes
NUM_CLS_OUT = NUM_CLASSES + 1                # cls head outputs (incl. background, last)
NUM_SCORES = 5                               # [class score, bbox left, top, right, bottom]
EPS = float(jnp.finfo(jnp.float32).eps)
BBOX_STDS = (0.1, 0.1, 0.2, 0.2)             # SSD DeltaXYWH coder target_stds

LEVEL_HW = tuple((IMG_H // s) * (IMG_W // s) for s in STRIDES)        # (64, 16, 4)
LEVEL_OFF = tuple(int(sum(LEVEL_HW[:i])) for i in range(NUM_LEVELS))  # (0, 64, 80)
HW_TOTAL = int(sum(LEVEL_HW))                # 84 real lanes
LANES = 128                                  # packed/padded lane width
BIAS_COL0 = NUM_LEVELS * FEAT_CHANNELS       # 24: ones-rows (folded biases) start here
PACK_K = 32                                  # 24 feature rows + 3 ones rows + pad
ROWS_PER_ANCHOR = 16                         # rows 0..4 cls, 8..11 bbox, rest zero
R_ROWS = LEVEL_HW[0] + LEVEL_HW[1]           # 80: resize matrix rows (levels x[:-1])

_SMEM = pl.BlockSpec(memory_space=pltpu.MemorySpace.SMEM)
_VMEM = pl.BlockSpec(memory_space=pltpu.MemorySpace.VMEM)


# ============================ the fused Pallas kernel ============================

def _odam_fused_kernel(tc_ref, meta_ref, f_ref, w_ref, pri_ref, r_ref, o_ref):
    """heads + softmax + decode + IoU argmax + analytic backward + CAM + resize/combine."""
    tc = tc_ref[0]
    tx1 = meta_ref[0]
    ty1 = meta_ref[1]
    tx2 = meta_ref[2]
    ty2 = meta_ref[3]
    h_img = meta_ref[4]
    w_img = meta_ref[5]
    tarea = (tx2 - tx1) * (ty2 - ty1)

    f = f_ref[...]                                        # (PACK_K, LANES) block-diag feats
    w = w_ref[...]                                        # (32, PACK_K) packed head weights

    # hoisted iotas (JAX does not CSE broadcast_in_dim)
    lane = jax.lax.broadcasted_iota(jnp.int32, (1, LANES), 1)
    cls_iota = jax.lax.broadcasted_iota(jnp.int32, (NUM_CLS_OUT, LANES), 0)
    valid = lane < HW_TOTAL                               # (1, LANES) real-lane mask

    # single block-diagonal matmul: both anchors' cls+bbox heads (+ folded biases),
    # all three levels at once.
    head = jnp.dot(w, f, preferred_element_type=jnp.float32)      # (32, LANES)

    per_anchor = []
    for a in range(NUM_ANCHORS):
        r0 = a * ROWS_PER_ANCHOR
        logits = head[r0:r0 + NUM_CLS_OUT]                # (5, LANES)
        # softmax over the class (sublane) axis
        m = jnp.max(logits, axis=0, keepdims=True)
        e = jnp.exp(logits - m)
        probs = e / jnp.sum(e, axis=0, keepdims=True)     # (5, LANES)
        score_tc = jnp.sum(jnp.where(cls_iota == tc, probs, 0.0),
                           axis=0, keepdims=True)         # (1, LANES)

        # DeltaXYWH decode (coords on sublanes, packed spatial on lanes)
        deltas = head[r0 + 8:r0 + 12]                     # (4, LANES)
        pri = pri_ref[a]                                  # (4, LANES)
        px = (pri[0:1] + pri[2:3]) * 0.5
        py = (pri[1:2] + pri[3:4]) * 0.5
        pw = pri[2:3] - pri[0:1]
        ph = pri[3:4] - pri[1:2]
        gx = px + pw * (deltas[0:1] * BBOX_STDS[0])
        gy = py + ph * (deltas[1:2] * BBOX_STDS[1])
        gw = pw * jnp.exp(deltas[2:3] * BBOX_STDS[2])
        gh = ph * jnp.exp(deltas[3:4] * BBOX_STDS[3])
        x1 = jnp.clip(gx - gw * 0.5, 0.0, w_img)
        y1 = jnp.clip(gy - gh * 0.5, 0.0, h_img)
        x2 = jnp.clip(gx + gw * 0.5, 0.0, w_img)
        y2 = jnp.clip(gy + gh * 0.5, 0.0, h_img)
        # scale_boxes with scale_factor == (1, 1) is the identity here.

        ix1 = jnp.maximum(x1, tx1)
        iy1 = jnp.maximum(y1, ty1)
        ix2 = jnp.minimum(x2, tx2)
        iy2 = jnp.minimum(y2, ty2)
        inter = jnp.maximum(ix2 - ix1, 0.0) * jnp.maximum(iy2 - iy1, 0.0)
        area = (x2 - x1) * (y2 - y1)
        union = jnp.maximum(area + tarea - inter, EPS)    # eps guard vs degenerate boxes
        iou = inter / union

        # weighted argmax over this anchor's packed lanes (padding lanes masked out)
        weighted = jnp.where(valid, iou * score_tc, -1.0)                    # (1, LANES)
        mx = jnp.max(weighted, axis=1, keepdims=True)                        # (1, 1)
        p = jnp.min(jnp.where(weighted >= mx, lane, LANES),
                    axis=1, keepdims=True)                                   # (1, 1) int32
        # class probs at this anchor's best column (gathered now so probs can die here)
        s_cand = jnp.sum(jnp.where(lane == p, probs, 0.0),
                         axis=1, keepdims=True)                              # (5, 1)
        per_anchor.append((mx, p, s_cand))

    # ---- global (iou * score) argmax over anchors; anchor 0 wins exact ties ----
    (mx0, p0, s0), (mx1, p1, s1) = per_anchor
    take1 = mx1 > mx0                                     # (1, 1) bool
    win_p = jnp.where(take1, p1, p0)                      # packed lane of retained prediction
    s_sel = jnp.where(take1, s1, s0)                      # (5, 1) probs at that prediction
    w_cls_win = jnp.where(take1, w[ROWS_PER_ANCHOR:ROWS_PER_ANCHOR + NUM_CLS_OUT],
                          w[0:NUM_CLS_OUT])               # (5, PACK_K)
    w_box_win = jnp.where(take1, w[ROWS_PER_ANCHOR + 8:ROWS_PER_ANCHOR + 12],
                          w[8:12])                        # (4, PACK_K)

    # ---- analytic backward of the 5 ODAM scalars w.r.t. the retained feature column ----
    # class score: d softmax(z)[tc]/dz = s_tc*(onehot_tc - s), chained through the winning
    # anchor's cls weights; bbox deltas: rows of the winning anchor's bbox weights.
    onehot = (jax.lax.broadcasted_iota(jnp.int32, (NUM_CLS_OUT, 1), 0) == tc
              ).astype(jnp.float32)                                          # (5, 1)
    s_tc = jnp.sum(s_sel * onehot, axis=0, keepdims=True)                    # (1, 1)
    v = s_tc * (onehot - s_sel)                                              # (5, 1)
    g_cls = jnp.sum(v * w_cls_win, axis=0, keepdims=True)                    # (1, PACK_K)
    g_all = jnp.concatenate([g_cls, w_box_win], axis=0)                      # (5, PACK_K)
    col = jax.lax.broadcasted_iota(jnp.int32, (NUM_SCORES, PACK_K), 1)
    g_all = jnp.where(col < BIAS_COL0, g_all, 0.0)        # ones/bias rows are not features

    # ---- CAM: relu((grad*feat).sum(C)) is non-zero only at the winning column ----
    proj = jnp.dot(g_all, f, preferred_element_type=jnp.float32)             # (5, LANES)
    win_mask = (lane == win_p).astype(jnp.float32)                           # (1, LANES)
    cam_val = jnp.maximum(jnp.sum(proj * win_mask, axis=1, keepdims=True), 0.0)   # (5, 1)
    # per-level min/max normalize: all non-winning positions are exactly 0 => min == 0
    cam_norm = cam_val * pl.reciprocal(jnp.maximum(cam_val, EPS), approx=True)    # (5, 1)

    # ---- fused bilinear resize + mean over levels x[:-1] via precomputed (80,1024) R ----
    # only the winning level's map is non-zero, the other contributes 0 => factor 0.5;
    # if the winner is the last level (lanes >= 80) the whole map is zero (as in the ref).
    lane_r = jax.lax.broadcasted_iota(jnp.int32, (1, R_ROWS), 1)
    cam_cat = (0.5 * cam_norm) * (lane_r == win_p).astype(jnp.float32)       # (5, R_ROWS)
    mean_map = jnp.dot(cam_cat, r_ref[...], preferred_element_type=jnp.float32)  # (5, 1024)

    # ---- per-score min/max normalize + max over the 5 score maps (lane-dense store) ----
    mn = jnp.min(mean_map, axis=1, keepdims=True)
    mxv = jnp.max(mean_map, axis=1, keepdims=True)
    norm = (mean_map - mn) * pl.reciprocal(jnp.maximum(mxv - mn, EPS), approx=True)
    o_ref[...] = jnp.max(norm, axis=0, keepdims=True)                        # (1, 1024)


def odam_saliency(tc, meta, f_pack, w_pack, priors_packed, r_cat):
    return pl.pallas_call(
        _odam_fused_kernel,
        out_shape=jax.ShapeDtypeStruct((1, IMG_HW), jnp.float32),
        in_specs=[_SMEM, _SMEM, _VMEM, _VMEM, _VMEM, _VMEM],
        out_specs=_VMEM,
    )(tc, meta, f_pack, w_pack, priors_packed, r_cat)


# ============================ setup: weights / priors / resize matrix ============================

def make_resize_matrix(h, w, H, W):
    """Bilinear (half-pixel centers, edge-clamped) resize as a linear map (h*w, H*W)."""
    # TODO(synk): cv2.resize(INTER_LINEAR) approximated with half-pixel bilinear weights
    # (equivalent to jax.image.resize('linear') for upsampling).
    def axis_mat(n_in, n_out):
        coords = (jnp.arange(n_out, dtype=jnp.float32) + 0.5) * (n_in / n_out) - 0.5
        lo = jnp.floor(coords)
        frac = coords - lo
        i0 = jnp.clip(lo.astype(jnp.int32), 0, n_in - 1)
        i1 = jnp.clip(lo.astype(jnp.int32) + 1, 0, n_in - 1)
        src = jnp.arange(n_in, dtype=jnp.int32)[:, None]
        m = jnp.where(src == i0[None, :], 1.0 - frac[None, :], 0.0)
        m = m + jnp.where(src == i1[None, :], frac[None, :], 0.0)
        return m                                           # (n_in, n_out)
    wy = axis_mat(h, IMG_H) if H == IMG_H else axis_mat(h, H)
    wy = axis_mat(h, H)
    wx = axis_mat(w, W)
    return jnp.einsum('iY,jX->ijYX', wy, wx).reshape(h * w, H * W)


def make_resize_cat():
    mats = []
    for stride in STRIDES[:-1]:                            # CAM uses x[:-1] only
        h, w = IMG_H // stride, IMG_W // stride
        mats.append(make_resize_matrix(h, w, IMG_H, IMG_W))
    return jnp.concatenate(mats, axis=0)                   # (80, 1024)


def make_priors_packed():
    """SSD-style grid priors, packed as (A, 4, 128): coords on sublanes, packed lanes."""
    pri = jnp.zeros((NUM_ANCHORS, 4, LANES), jnp.float32)
    for l, stride in enumerate(STRIDES):
        h, w = IMG_H // stride, IMG_W // stride
        ys, xs = jnp.meshgrid(jnp.arange(h, dtype=jnp.float32),
                              jnp.arange(w, dtype=jnp.float32), indexing='ij')
        cx = ((xs + 0.5) * stride).reshape(-1)
        cy = ((ys + 0.5) * stride).reshape(-1)
        half = jnp.array([2.0 * stride, 3.0 * stride], jnp.float32) * 0.5   # NUM_ANCHORS = 2
        off = LEVEL_OFF[l]
        for a in range(NUM_ANCHORS):
            box = jnp.stack([cx - half[a], cy - half[a], cx + half[a], cy + half[a]], axis=0)
            pri = pri.at[a, :, off:off + h * w].set(box)
    return pri


def init_params(key):
    keys = jax.random.split(key, NUM_LEVELS * 5)
    proj_mats = []
    # packed head weights: per anchor 16 rows (0..4 cls incl. bg, 8..11 bbox), K = 32 cols
    # (cols 8l..8l+7 = level-l channels, cols 24+l = level-l folded bias, rest zero pad).
    w_pack = jnp.zeros((NUM_ANCHORS * ROWS_PER_ANCHOR, PACK_K), jnp.float32)
    ki = 0
    for l in range(NUM_LEVELS):
        proj_mats.append(jax.random.normal(keys[ki], (3, FEAT_CHANNELS), jnp.float32) * 0.5)
        ki += 1
        wc = jax.random.normal(keys[ki], (FEAT_CHANNELS, NUM_ANCHORS * NUM_CLS_OUT),
                               jnp.float32) * 0.3
        ki += 1
        wb = jax.random.normal(keys[ki], (FEAT_CHANNELS, NUM_ANCHORS * 4), jnp.float32) * 0.1
        ki += 1
        bc = jax.random.normal(keys[ki], (NUM_ANCHORS, NUM_CLS_OUT), jnp.float32) * 0.05
        ki += 1
        bb = jax.random.normal(keys[ki], (NUM_ANCHORS, 4), jnp.float32) * 0.05
        ki += 1
        wc_a = wc.T.reshape(NUM_ANCHORS, NUM_CLS_OUT, FEAT_CHANNELS)
        wb_a = wb.T.reshape(NUM_ANCHORS, 4, FEAT_CHANNELS)
        cols = slice(l * FEAT_CHANNELS, (l + 1) * FEAT_CHANNELS)
        for a in range(NUM_ANCHORS):
            r0 = a * ROWS_PER_ANCHOR
            w_pack = w_pack.at[r0:r0 + NUM_CLS_OUT, cols].set(wc_a[a])
            w_pack = w_pack.at[r0:r0 + NUM_CLS_OUT, BIAS_COL0 + l].set(bc[a])
            w_pack = w_pack.at[r0 + 8:r0 + 12, cols].set(wb_a[a])
            w_pack = w_pack.at[r0 + 8:r0 + 12, BIAS_COL0 + l].set(bb[a])
    priors_packed = make_priors_packed()
    r_cat = make_resize_cat()
    return tuple(proj_mats), w_pack, priors_packed, r_cat


# ============================ glue (plain JAX, all under jit) ============================

def extract_feat(image_hwc, proj_mats):
    # synthetic backbone: strided average pooling + fixed channel projection (stands in
    # for detection_model.extract_feat; ODAM only needs x and grads w.r.t. x).
    x = jnp.transpose(image_hwc, (2, 0, 1)).astype(jnp.float32)            # (3, H, W)
    _, H, W = x.shape
    feats = []
    for proj, stride in zip(proj_mats, STRIDES):
        h, w = H // stride, W // stride
        pooled = x.reshape(3, h, stride, w, stride).mean(axis=(2, 4))      # (3, h, w)
        feats.append(jnp.einsum('chw,cd->dhw', pooled, proj))              # (C, h, w)
    return feats


def pack_features(feats):
    # block-diagonal packing: level-l channels on sublanes 8l..8l+7 at lanes
    # LEVEL_OFF[l]..+hw_l, plus a ones-row per level (folds the head bias); zero pad.
    f_pack = jnp.zeros((PACK_K, LANES), jnp.float32)
    for l, feat in enumerate(feats):
        hw, off = LEVEL_HW[l], LEVEL_OFF[l]
        flat = feat.reshape(FEAT_CHANNELS, hw)
        f_pack = f_pack.at[l * FEAT_CHANNELS:(l + 1) * FEAT_CHANNELS, off:off + hw].set(flat)
        f_pack = f_pack.at[BIAS_COL0 + l, off:off + hw].set(1.0)
    return f_pack


@jax.jit
def ssd_odam_forward(image, target_class, target_box, params):
    proj_mats, w_pack, priors_packed, r_cat = params
    h_img, w_img, _ = image.shape

    feats = extract_feat(image, proj_mats)
    f_pack = pack_features(feats)

    tc = jnp.asarray(target_class, jnp.int32).reshape((1,))
    meta = jnp.concatenate([jnp.asarray(target_box, jnp.float32).reshape(4),
                            jnp.array([float(h_img), float(w_img)], jnp.float32)])

    sal = odam_saliency(tc, meta, f_pack, w_pack, priors_packed, r_cat)    # (1, H*W)
    return sal.reshape(h_img, w_img)


if __name__ == "__main__":
    key = jax.random.PRNGKey(0)
    k_img, k_par = jax.random.split(key)
    image = jax.random.uniform(k_img, (IMG_H, IMG_W, 3), jnp.float32)      # HWC "ndarray" image
    params = init_params(k_par)
    target_box = jnp.array([4.0, 4.0, 20.0, 20.0], jnp.float32)
    target_class = jnp.int32(1)

    out = ssd_odam_forward(image, target_class, target_box, params)
    out = jax.block_until_ready(out)
    assert out.shape == (IMG_H, IMG_W)
    assert bool(jnp.all(jnp.isfinite(out)))
    print("KERNEL_OK")
</pallas_src>

<mosaic_0001>
module attributes {stable_mosaic.version = 11 : i64} {
  func.func @_odam_fused_kernel(%arg0: memref<1xi32, #tpu.memory_space<smem>>, %arg1: memref<6xf32, #tpu.memory_space<smem>>, %arg2: memref<32x128xf32, #tpu.memory_space<vmem>>, %arg3: memref<32x32xf32, #tpu.memory_space<vmem>>, %arg4: memref<2x4x128xf32, #tpu.memory_space<vmem>>, %arg5: memref<80x1024xf32, #tpu.memory_space<vmem>>, %arg6: memref<1x1024xf32, #tpu.memory_space<vmem>>) attributes {dimension_semantics = [], scalar_prefetch = 0 : i64, scratch_operands = 0 : i64, tpu.core_type = #tpu.core_type<tc>} {
    %c0 = arith.constant 0 : index
    %0 = memref.load %arg0[%c0] : memref<1xi32, #tpu.memory_space<smem>>
    %c0_0 = arith.constant 0 : index
    %1 = memref.load %arg1[%c0_0] : memref<6xf32, #tpu.memory_space<smem>>
    %c1 = arith.constant 1 : index
    %2 = memref.load %arg1[%c1] : memref<6xf32, #tpu.memory_space<smem>>
    %c2 = arith.constant 2 : index
    %3 = memref.load %arg1[%c2] : memref<6xf32, #tpu.memory_space<smem>>
    %c3 = arith.constant 3 : index
    %4 = memref.load %arg1[%c3] : memref<6xf32, #tpu.memory_space<smem>>
    %c4 = arith.constant 4 : index
    %5 = memref.load %arg1[%c4] : memref<6xf32, #tpu.memory_space<smem>>
    %c5 = arith.constant 5 : index
    %6 = memref.load %arg1[%c5] : memref<6xf32, #tpu.memory_space<smem>>
    %7 = arith.subf %3, %1 : f32
    %8 = arith.subf %4, %2 : f32
    %9 = arith.mulf %7, %8 : f32
    %c0_1 = arith.constant 0 : index
    %c0_2 = arith.constant 0 : index
    %10 = vector.load %arg2[%c0_1, %c0_2] : memref<32x128xf32, #tpu.memory_space<vmem>>, vector<32x128xf32>
    %c0_3 = arith.constant 0 : index
    %c0_4 = arith.constant 0 : index
    %11 = vector.load %arg3[%c0_3, %c0_4] : memref<32x32xf32, #tpu.memory_space<vmem>>, vector<32x32xf32>
    %12 = tpu.iota {dimensions = array<i32: 1>} : vector<1x128xi32>
    %13 = tpu.iota {dimensions = array<i32: 0>} : vector<5x128xi32>
    %c84_i32 = arith.constant 84 : i32
    %14 = vector.broadcast %c84_i32 : i32 to vector<1x128xi32>
    %15 = arith.cmpi slt, %12, %14 : vector<1x128xi32>
    %cst = arith.constant dense<0.000000e+00> : vector<32x128xf32>
    %16 = tpu.matmul %11, %10, %cst {dimension_numbers = #tpu.dot_dimension_numbers<[1], [0], [0], [1], [0, 0, 1, 1], [], []>} : vector<32x32xf32>, vector<32x128xf32>, vector<32x128xf32> -> vector<32x128xf32>
    %17 = vector.extract_strided_slice %16 {offsets = [0, 0], sizes = [5, 128], strides = [1, 1]} : vector<32x128xf32> to vector<5x128xf32>
    %cst_5 = arith.constant dense<0xFF800000> : vector<128xf32>
    %18 = vector.multi_reduction <maximumf>, %17, %cst_5 [0] : vector<5x128xf32> to vector<128xf32>
    %19 = vector.shape_cast %18 : vector<128xf32> to vector<1x128xf32>
    %20 = vector.broadcast %19 : vector<1x128xf32> to vector<5x128xf32>
    %21 = arith.subf %17, %20 : vector<5x128xf32>
    %22 = math.exp %21 : vector<5x128xf32>
    %cst_6 = arith.constant dense<0.000000e+00> : vector<128xf32>
    %23 = vector.multi_reduction <add>, %22, %cst_6 [0] : vector<5x128xf32> to vector<128xf32>
    %24 = vector.shape_cast %23 : vector<128xf32> to vector<1x128xf32>
    %25 = vector.broadcast %24 : vector<1x128xf32> to vector<5x128xf32>
    %26 = arith.divf %22, %25 : vector<5x128xf32>
    %27 = vector.broadcast %0 : i32 to vector<5x128xi32>
    %28 = arith.cmpi eq, %13, %27 : vector<5x128xi32>
    %cst_7 = arith.constant 0.000000e+00 : f32
    %29 = vector.broadcast %cst_7 : f32 to vector<5x128xf32>
    %30 = arith.select %28, %26, %29 : vector<5x128xi1>, vector<5x128xf32>
    %cst_8 = arith.constant dense<0.000000e+00> : vector<128xf32>
    %31 = vector.multi_reduction <add>, %30, %cst_8 [0] : vector<5x128xf32> to vector<128xf32>
    %32 = vector.shape_cast %31 : vector<128xf32> to vector<1x128xf32>
    %33 = vector.extract_strided_slice %16 {offsets = [8, 0], sizes = [4, 128], strides = [1, 1]} : vector<32x128xf32> to vector<4x128xf32>
    %c0_9 = arith.constant 0 : index
    %c0_10 = arith.constant 0 : index
    %c0_11 = arith.constant 0 : index
    %34 = vector.load %arg4[%c0_9, %c0_10, %c0_11] : memref<2x4x128xf32, #tpu.memory_space<vmem>>, vector<1x4x128xf32>
    %35 = vector.shape_cast %34 : vector<1x4x128xf32> to vector<4x128xf32>
    %36 = vector.extract_strided_slice %35 {offsets = [0, 0], sizes = [1, 128], strides = [1, 1]} : vector<4x128xf32> to vector<1x128xf32>
    %37 = vector.extract_strided_slice %35 {offsets = [2, 0], sizes = [1, 128], strides = [1, 1]} : vector<4x128xf32> to vector<1x128xf32>
    %38 = arith.addf %36, %37 : vector<1x128xf32>
    %cst_12 = arith.constant 5.000000e-01 : f32
    %39 = vector.broadcast %cst_12 : f32 to vector<1x128xf32>
    %40 = arith.mulf %38, %39 : vector<1x128xf32>
    %41 = vector.extract_strided_slice %35 {offsets = [1, 0], sizes = [1, 128], strides = [1, 1]} : vector<4x128xf32> to vector<1x128xf32>
    %42 = vector.extract_strided_slice %35 {offsets = [3, 0], sizes = [1, 128], strides = [1, 1]} : vector<4x128xf32> to vector<1x128xf32>
    %43 = arith.addf %41, %42 : vector<1x128xf32>
    %cst_13 = arith.constant 5.000000e-01 : f32
    %44 = vector.broadcast %cst_13 : f32 to vector<1x128xf32>
    %45 = arith.mulf %43, %44 : vector<1x128xf32>
    %46 = vector.extract_strided_slice %35 {offsets = [2, 0], sizes = [1, 128], strides = [1, 1]} : vector<4x128xf32> to vector<1x128xf32>
    %47 = vector.extract_strided_slice %35 {offsets = [0, 0], sizes = [1, 128], strides = [1, 1]} : vector<4x128xf32> to vector<1x128xf32>
    %48 = arith.subf %46, %47 : vector<1x128xf32>
    %49 = vector.extract_strided_slice %35 {offsets = [3, 0], sizes = [1, 128], strides = [1, 1]} : vector<4x128xf32> to vector<1x128xf32>
    %50 = vector.extract_strided_slice %35 {offsets = [1, 0], sizes = [1, 128], strides = [1, 1]} : vector<4x128xf32> to vector<1x128xf32>
    %51 = arith.subf %49, %50 : vector<1x128xf32>
    %52 = vector.extract_strided_slice %33 {offsets = [0, 0], sizes = [1, 128], strides = [1, 1]} : vector<4x128xf32> to vector<1x128xf32>
    %cst_14 = arith.constant 1.000000e-01 : f32
    %53 = vector.broadcast %cst_14 : f32 to vector<1x128xf32>
    %54 = arith.mulf %52, %53 : vector<1x128xf32>
    %55 = arith.mulf %48, %54 : vector<1x128xf32>
    %56 = arith.addf %40, %55 : vector<1x128xf32>
    %57 = vector.extract_strided_slice %33 {offsets = [1, 0], sizes = [1, 128], strides = [1, 1]} : vector<4x128xf32> to vector<1x128xf32>
    %cst_15 = arith.constant 1.000000e-01 : f32
    %58 = vector.broadcast %cst_15 : f32 to vector<1x128xf32>
    %59 = arith.mulf %57, %58 : vector<1x128xf32>
    %60 = arith.mulf %51, %59 : vector<1x128xf32>
    %61 = arith.addf %45, %60 : vector<1x128xf32>
    %62 = vector.extract_strided_slice %33 {offsets = [2, 0], sizes = [1, 128], strides = [1, 1]} : vector<4x128xf32> to vector<1x128xf32>
    %cst_16 = arith.constant 2.000000e-01 : f32
    %63 = vector.broadcast %cst_16 : f32 to vector<1x128xf32>
    %64 = arith.mulf %62, %63 : vector<1x128xf32>
    %65 = math.exp %64 : vector<1x128xf32>
    %66 = arith.mulf %48, %65 : vector<1x128xf32>
    %67 = vector.extract_strided_slice %33 {offsets = [3, 0], sizes = [1, 128], strides = [1, 1]} : vector<4x128xf32> to vector<1x128xf32>
    %cst_17 = arith.constant 2.000000e-01 : f32
    %68 = vector.broadcast %cst_17 : f32 to vector<1x128xf32>
    %69 = arith.mulf %67, %68 : vector<1x128xf32>
    %70 = math.exp %69 : vector<1x128xf32>
    %71 = arith.mulf %51, %70 : vector<1x128xf32>
    %cst_18 = arith.constant 5.000000e-01 : f32
    %72 = vector.broadcast %cst_18 : f32 to vector<1x128xf32>
    %73 = arith.mulf %66, %72 : vector<1x128xf32>
    %74 = arith.subf %56, %73 : vector<1x128xf32>
    %cst_19 = arith.constant 0.000000e+00 : f32
    %75 = vector.broadcast %cst_19 : f32 to vector<1x128xf32>
    %76 = arith.maximumf %75, %74 : vector<1x128xf32>
    %77 = vector.broadcast %6 : f32 to vector<1x128xf32>
    %78 = arith.minimumf %77, %76 : vector<1x128xf32>
    %cst_20 = arith.constant 5.000000e-01 : f32
    %79 = vector.broadcast %cst_20 : f32 to vector<1x128xf32>
    %80 = arith.mulf %71, %79 : vector<1x128xf32>
    %81 = arith.subf %61, %80 : vector<1x128xf32>
    %cst_21 = arith.constant 0.000000e+00 : f32
    %82 = vector.broadcast %cst_21 : f32 to vector<1x128xf32>
    %83 = arith.maximumf %82, %81 : vector<1x128xf32>
    %84 = vector.broadcast %5 : f32 to vector<1x128xf32>
    %85 = arith.minimumf %84, %83 : vector<1x128xf32>
    %cst_22 = arith.constant 5.000000e-01 : f32
    %86 = vector.broadcast %cst_22 : f32 to vector<1x128xf32>
    %87 = arith.mulf %66, %86 : vector<1x128xf32>
    %88 = arith.addf %56, %87 : vector<1x128xf32>
    %cst_23 = arith.constant 0.000000e+00 : f32
    %89 = vector.broadcast %cst_23 : f32 to vector<1x128xf32>
    %90 = arith.maximumf %89, %88 : vector<1x128xf32>
    %91 = vector.broadcast %6 : f32 to vector<1x128xf32>
    %92 = arith.minimumf %91, %90 : vector<1x128xf32>
    %cst_24 = arith.constant 5.000000e-01 : f32
    %93 = vector.broadcast %cst_24 : f32 to vector<1x128xf32>
    %94 = arith.mulf %71, %93 : vector<1x128xf32>
    %95 = arith.addf %61, %94 : vector<1x128xf32>
    %cst_25 = arith.constant 0.000000e+00 : f32
    %96 = vector.broadcast %cst_25 : f32 to vector<1x128xf32>
    %97 = arith.maximumf %96, %95 : vector<1x128xf32>
    %98 = vector.broadcast %5 : f32 to vector<1x128xf32>
    %99 = arith.minimumf %98, %97 : vector<1x128xf32>
    %100 = vector.broadcast %1 : f32 to vector<1x128xf32>
    %101 = arith.maximumf %78, %100 : vector<1x128xf32>
    %102 = vector.broadcast %2 : f32 to vector<1x128xf32>
    %103 = arith.maximumf %85, %102 : vector<1x128xf32>
    %104 = vector.broadcast %3 : f32 to vector<1x128xf32>
    %105 = arith.minimumf %92, %104 : vector<1x128xf32>
    %106 = vector.broadcast %4 : f32 to vector<1x128xf32>
    %107 = arith.minimumf %99, %106 : vector<1x128xf32>
    %108 = arith.subf %105, %101 : vector<1x128xf32>
    %cst_26 = arith.constant 0.000000e+00 : f32
    %109 = vector.broadcast %cst_26 : f32 to vector<1x128xf32>
    %110 = arith.maximumf %108, %109 : vector<1x128xf32>
    %111 = arith.subf %107, %103 : vector<1x128xf32>
    %cst_27 = arith.constant 0.000000e+00 : f32
    %112 = vector.broadcast %cst_27 : f32 to vector<1x128xf32>
    %113 = arith.maximumf %111, %112 : vector<1x128xf32>
    %114 = arith.mulf %110, %113 : vector<1x128xf32>
    %115 = arith.subf %92, %78 : vector<1x128xf32>
    %116 = arith.subf %99, %85 : vector<1x128xf32>
    %117 = arith.mulf %115, %116 : vector<1x128xf32>
    %118 = vector.broadcast %9 : f32 to vector<1x128xf32>
    %119 = arith.addf %117, %118 : vector<1x128xf32>
    %120 = arith.subf %119, %114 : vector<1x128xf32>
    %cst_28 = arith.constant 1.1920929E-7 : f32
    %121 = vector.broadcast %cst_28 : f32 to vector<1x128xf32>
    %122 = arith.maximumf %120, %121 : vector<1x128xf32>
    %123 = arith.divf %114, %122 : vector<1x128xf32>
    %124 = arith.mulf %123, %32 : vector<1x128xf32>
    %cst_29 = arith.constant -1.000000e+00 : f32
    %125 = vector.broadcast %cst_29 : f32 to vector<1x128xf32>
    %126 = arith.select %15, %124, %125 : vector<1x128xi1>, vector<1x128xf32>
    %cst_30 = arith.constant dense<0xFF800000> : vector<1xf32>
    %127 = vector.multi_reduction <maximumf>, %126, %cst_30 [1] : vector<1x128xf32> to vector<1xf32>
    %128 = vector.shape_cast %127 : vector<1xf32> to vector<1x1xf32>
    %129 = vector.broadcast %128 : vector<1x1xf32> to vector<1x128xf32>
    %130 = arith.cmpf oge, %126, %129 : vector<1x128xf32>
    %c128_i32 = arith.constant 128 : i32
    %131 = vector.broadcast %c128_i32 : i32 to vector<1x128xi32>
    %132 = arith.select %130, %12, %131 : vector<1x128xi1>, vector<1x128xi32>
    %cst_31 = arith.constant dense<2147483647> : vector<1xi32>
    %133 = vector.multi_reduction <minsi>, %132, %cst_31 [1] : vector<1x128xi32> to vector<1xi32>
    %134 = vector.shape_cast %133 : vector<1xi32> to vector<1x1xi32>
    %135 = vector.broadcast %134 : vector<1x1xi32> to vector<1x128xi32>
    %136 = arith.cmpi eq, %12, %135 : vector<1x128xi32>
    %cst_32 = arith.constant 0.000000e+00 : f32
    %137 = vector.shape_cast %136 : vector<1x128xi1> to vector<1x128xi1>
    %138 = vector.broadcast %137 : vector<1x128xi1> to vector<5x128xi1>
    %139 = vector.broadcast %cst_32 : f32 to vector<5x128xf32>
    %140 = arith.select %138, %26, %139 : vector<5x128xi1>, vector<5x128xf32>
    %cst_33 = arith.constant dense<0.000000e+00> : vector<5xf32>
    %141 = vector.multi_reduction <add>, %140, %cst_33 [1] : vector<5x128xf32> to vector<5xf32>
    %142 = vector.shape_cast %141 : vector<5xf32> to vector<5x1xf32>
    %143 = vector.extract_strided_slice %16 {offsets = [16, 0], sizes = [5, 128], strides = [1, 1]} : vector<32x128xf32> to vector<5x128xf32>
    %cst_34 = arith.constant dense<0xFF800000> : vector<128xf32>
    %144 = vector.multi_reduction <maximumf>, %143, %cst_34 [0] : vector<5x128xf32> to vector<128xf32>
    %145 = vector.shape_cast %144 : vector<128xf32> to vector<1x128xf32>
    %146 = vector.broadcast %145 : vector<1x128xf32> to vector<5x128xf32>
    %147 = arith.subf %143, %146 : vector<5x128xf32>
    %148 = math.exp %147 : vector<5x128xf32>
    %cst_35 = arith.constant dense<0.000000e+00> : vector<128xf32>
    %149 = vector.multi_reduction <add>, %148, %cst_35 [0] : vector<5x128xf32> to vector<128xf32>
    %150 = vector.shape_cast %149 : vector<128xf32> to vector<1x128xf32>
    %151 = vector.broadcast %150 : vector<1x128xf32> to vector<5x128xf32>
    %152 = arith.divf %148, %151 : vector<5x128xf32>
    %153 = vector.broadcast %0 : i32 to vector<5x128xi32>
    %154 = arith.cmpi eq, %13, %153 : vector<5x128xi32>
    %cst_36 = arith.constant 0.000000e+00 : f32
    %155 = vector.broadcast %cst_36 : f32 to vector<5x128xf32>
    %156 = arith.select %154, %152, %155 : vector<5x128xi1>, vector<5x128xf32>
    %cst_37 = arith.constant dense<0.000000e+00> : vector<128xf32>
    %157 = vector.multi_reduction <add>, %156, %cst_37 [0] : vector<5x128xf32> to vector<128xf32>
    %158 = vector.shape_cast %157 : vector<128xf32> to vector<1x128xf32>
    %159 = vector.extract_strided_slice %16 {offsets = [24, 0], sizes = [4, 128], strides = [1, 1]} : vector<32x128xf32> to vector<4x128xf32>
    %c1_38 = arith.constant 1 : index
    %c0_39 = arith.constant 0 : index
    %c0_40 = arith.constant 0 : index
    %160 = vector.load %arg4[%c1_38, %c0_39, %c0_40] : memref<2x4x128xf32, #tpu.memory_space<vmem>>, vector<1x4x128xf32>
    %161 = vector.shape_cast %160 : vector<1x4x128xf32> to vector<4x128xf32>
    %162 = vector.extract_strided_slice %161 {offsets = [0, 0], sizes = [1, 128], strides = [1, 1]} : vector<4x128xf32> to vector<1x128xf32>
    %163 = vector.extract_strided_slice %161 {offsets = [2, 0], sizes = [1, 128], strides = [1, 1]} : vector<4x128xf32> to vector<1x128xf32>
    %164 = arith.addf %162, %163 : vector<1x128xf32>
    %cst_41 = arith.constant 5.000000e-01 : f32
    %165 = vector.broadcast %cst_41 : f32 to vector<1x128xf32>
    %166 = arith.mulf %164, %165 : vector<1x128xf32>
    %167 = vector.extract_strided_slice %161 {offsets = [1, 0], sizes = [1, 128], strides = [1, 1]} : vector<4x128xf32> to vector<1x128xf32>
    %168 = vector.extract_strided_slice %161 {offsets = [3, 0], sizes = [1, 128], strides = [1, 1]} : vector<4x128xf32> to vector<1x128xf32>
    %169 = arith.addf %167, %168 : vector<1x128xf32>
    %cst_42 = arith.constant 5.000000e-01 : f32
    %170 = vector.broadcast %cst_42 : f32 to vector<1x128xf32>
    %171 = arith.mulf %169, %170 : vector<1x128xf32>
    %172 = vector.extract_strided_slice %161 {offsets = [2, 0], sizes = [1, 128], strides = [1, 1]} : vector<4x128xf32> to vector<1x128xf32>
    %173 = vector.extract_strided_slice %161 {offsets = [0, 0], sizes = [1, 128], strides = [1, 1]} : vector<4x128xf32> to vector<1x128xf32>
    %174 = arith.subf %172, %173 : vector<1x128xf32>
    %175 = vector.extract_strided_slice %161 {offsets = [3, 0], sizes = [1, 128], strides = [1, 1]} : vector<4x128xf32> to vector<1x128xf32>
    %176 = vector.extract_strided_slice %161 {offsets = [1, 0], sizes = [1, 128], strides = [1, 1]} : vector<4x128xf32> to vector<1x128xf32>
    %177 = arith.subf %175, %176 : vector<1x128xf32>
    %178 = vector.extract_strided_slice %159 {offsets = [0, 0], sizes = [1, 128], strides = [1, 1]} : vector<4x128xf32> to vector<1x128xf32>
    %cst_43 = arith.constant 1.000000e-01 : f32
    %179 = vector.broadcast %cst_43 : f32 to vector<1x128xf32>
    %180 = arith.mulf %178, %179 : vector<1x128xf32>
    %181 = arith.mulf %174, %180 : vector<1x128xf32>
    %182 = arith.addf %166, %181 : vector<1x128xf32>
    %183 = vector.extract_strided_slice %159 {offsets = [1, 0], sizes = [1, 128], strides = [1, 1]} : vector<4x128xf32> to vector<1x128xf32>
    %cst_44 = arith.constant 1.000000e-01 : f32
    %184 = vector.broadcast %cst_44 : f32 to vector<1x128xf32>
    %185 = arith.mulf %183, %184 : vector<1x128xf32>
    %186 = arith.mulf %177, %185 : vector<1x128xf32>
    %187 = arith.addf %171, %186 : vector<1x128xf32>
    %188 = vector.extract_strided_slice %159 {offsets = [2, 0], sizes = [1, 128], strides = [1, 1]} : vector<4x128xf32> to vector<1x128xf32>
    %cst_45 = arith.constant 2.000000e-01 : f32
    %189 = vector.broadcast %cst_45 : f32 to vector<1x128xf32>
    %190 = arith.mulf %188, %189 : vector<1x128xf32>
    %191 = math.exp %190 : vector<1x128xf32>
    %192 = arith.mulf %174, %191 : vector<1x128xf32>
    %193 = vector.extract_strided_slice %159 {offsets = [3, 0], sizes = [1, 128], strides = [1, 1]} : vector<4x128xf32> to vector<1x128xf32>
    %cst_46 = arith.constant 2.000000e-01 : f32
    %194 = vector.broadcast %cst_46 : f32 to vector<1x128xf32>
    %195 = arith.mulf %193, %194 : vector<1x128xf32>
    %196 = math.exp %195 : vector<1x128xf32>
    %197 = arith.mulf %177, %196 : vector<1x128xf32>
    %cst_47 = arith.constant 5.000000e-01 : f32
    %198 = vector.broadcast %cst_47 : f32 to vector<1x128xf32>
    %199 = arith.mulf %192, %198 : vector<1x128xf32>
    %200 = arith.subf %182, %199 : vector<1x128xf32>
    %cst_48 = arith.constant 0.000000e+00 : f32
    %201 = vector.broadcast %cst_48 : f32 to vector<1x128xf32>
    %202 = arith.maximumf %201, %200 : vector<1x128xf32>
    %203 = vector.broadcast %6 : f32 to vector<1x128xf32>
    %204 = arith.minimumf %203, %202 : vector<1x128xf32>
    %cst_49 = arith.constant 5.000000e-01 : f32
    %205 = vector.broadcast %cst_49 : f32 to vector<1x128xf32>
    %206 = arith.mulf %197, %205 : vector<1x128xf32>
    %207 = arith.subf %187, %206 : vector<1x128xf32>
    %cst_50 = arith.constant 0.000000e+00 : f32
    %208 = vector.broadcast %cst_50 : f32 to vector<1x128xf32>
    %209 = arith.maximumf %208, %207 : vector<1x128xf32>
    %210 = vector.broadcast %5 : f32 to vector<1x128xf32>
    %211 = arith.minimumf %210, %209 : vector<1x128xf32>
    %cst_51 = arith.constant 5.000000e-01 : f32
    %212 = vector.broadcast %cst_51 : f32 to vector<1x128xf32>
    %213 = arith.mulf %192, %212 : vector<1x128xf32>
    %214 = arith.addf %182, %213 : vector<1x128xf32>
    %cst_52 = arith.constant 0.000000e+00 : f32
    %215 = vector.broadcast %cst_52 : f32 to vector<1x128xf32>
    %216 = arith.maximumf %215, %214 : vector<1x128xf32>
    %217 = vector.broadcast %6 : f32 to vector<1x128xf32>
    %218 = arith.minimumf %217, %216 : vector<1x128xf32>
    %cst_53 = arith.constant 5.000000e-01 : f32
    %219 = vector.broadcast %cst_53 : f32 to vector<1x128xf32>
    %220 = arith.mulf %197, %219 : vector<1x128xf32>
    %221 = arith.addf %187, %220 : vector<1x128xf32>
    %cst_54 = arith.constant 0.000000e+00 : f32
    %222 = vector.broadcast %cst_54 : f32 to vector<1x128xf32>
    %223 = arith.maximumf %222, %221 : vector<1x128xf32>
    %224 = vector.broadcast %5 : f32 to vector<1x128xf32>
    %225 = arith.minimumf %224, %223 : vector<1x128xf32>
    %226 = vector.broadcast %1 : f32 to vector<1x128xf32>
    %227 = arith.maximumf %204, %226 : vector<1x128xf32>
    %228 = vector.broadcast %2 : f32 to vector<1x128xf32>
    %229 = arith.maximumf %211, %228 : vector<1x128xf32>
    %230 = vector.broadcast %3 : f32 to vector<1x128xf32>
    %231 = arith.minimumf %218, %230 : vector<1x128xf32>
    %232 = vector.broadcast %4 : f32 to vector<1x128xf32>
    %233 = arith.minimumf %225, %232 : vector<1x128xf32>
    %234 = arith.subf %231, %227 : vector<1x128xf32>
    %cst_55 = arith.constant 0.000000e+00 : f32
    %235 = vector.broadcast %cst_55 : f32 to vector<1x128xf32>
    %236 = arith.maximumf %234, %235 : vector<1x128xf32>
    %237 = arith.subf %233, %229 : vector<1x128xf32>
    %cst_56 = arith.constant 0.000000e+00 : f32
    %238 = vector.broadcast %cst_56 : f32 to vector<1x128xf32>
    %239 = arith.maximumf %237, %238 : vector<1x128xf32>
    %240 = arith.mulf %236, %239 : vector<1x128xf32>
    %241 = arith.subf %218, %204 : vector<1x128xf32>
    %242 = arith.subf %225, %211 : vector<1x128xf32>
    %243 = arith.mulf %241, %242 : vector<1x128xf32>
    %244 = vector.broadcast %9 : f32 to vector<1x128xf32>
    %245 = arith.addf %243, %244 : vector<1x128xf32>
    %246 = arith.subf %245, %240 : vector<1x128xf32>
    %cst_57 = arith.constant 1.1920929E-7 : f32
    %247 = vector.broadcast %cst_57 : f32 to vector<1x128xf32>
    %248 = arith.maximumf %246, %247 : vector<1x128xf32>
    %249 = arith.divf %240, %248 : vector<1x128xf32>
    %250 = arith.mulf %249, %158 : vector<1x128xf32>
    %cst_58 = arith.constant -1.000000e+00 : f32
    %251 = vector.broadcast %cst_58 : f32 to vector<1x128xf32>
    %252 = arith.select %15, %250, %251 : vector<1x128xi1>, vector<1x128xf32>
    %cst_59 = arith.constant dense<0xFF800000> : vector<1xf32>
    %253 = vector.multi_reduction <maximumf>, %252, %cst_59 [1] : vector<1x128xf32> to vector<1xf32>
    %254 = vector.shape_cast %253 : vector<1xf32> to vector<1x1xf32>
    %255 = vector.broadcast %254 : vector<1x1xf32> to vector<1x128xf32>
    %256 = arith.cmpf oge, %252, %255 : vector<1x128xf32>
    %c128_i32_60 = arith.constant 128 : i32
    %257 = vector.broadcast %c128_i32_60 : i32 to vector<1x128xi32>
    %258 = arith.select %256, %12, %257 : vector<1x128xi1>, vector<1x128xi32>
    %cst_61 = arith.constant dense<2147483647> : vector<1xi32>
    %259 = vector.multi_reduction <minsi>, %258, %cst_61 [1] : vector<1x128xi32> to vector<1xi32>
    %260 = vector.shape_cast %259 : vector<1xi32> to vector<1x1xi32>
    %261 = vector.broadcast %260 : vector<1x1xi32> to vector<1x128xi32>
    %262 = arith.cmpi eq, %12, %261 : vector<1x128xi32>
    %cst_62 = arith.constant 0.000000e+00 : f32
    %263 = vector.shape_cast %262 : vector<1x128xi1> to vector<1x128xi1>
    %264 = vector.broadcast %263 : vector<1x128xi1> to vector<5x128xi1>
    %265 = vector.broadcast %cst_62 : f32 to vector<5x128xf32>
    %266 = arith.select %264, %152, %265 : vector<5x128xi1>, vector<5x128xf32>
    %cst_63 = arith.constant dense<0.000000e+00> : vector<5xf32>
    %267 = vector.multi_reduction <add>, %266, %cst_63 [1] : vector<5x128xf32> to vector<5xf32>
    %268 = vector.shape_cast %267 : vector<5xf32> to vector<5x1xf32>
    %269 = arith.cmpf ogt, %254, %128 : vector<1x1xf32>
    %270 = arith.select %269, %260, %134 : vector<1x1xi1>, vector<1x1xi32>
    %271 = vector.shape_cast %269 : vector<1x1xi1> to vector<1x1xi1>
    %272 = vector.broadcast %271 : vector<1x1xi1> to vector<5x1xi1>
    %273 = arith.select %272, %268, %142 : vector<5x1xi1>, vector<5x1xf32>
    %274 = vector.extract_strided_slice %11 {offsets = [16, 0], sizes = [5, 32], strides = [1, 1]} : vector<32x32xf32> to vector<5x32xf32>
    %275 = vector.extract_strided_slice %11 {offsets = [0, 0], sizes = [5, 32], strides = [1, 1]} : vector<32x32xf32> to vector<5x32xf32>
    %276 = vector.shape_cast %269 : vector<1x1xi1> to vector<1x1xi1>
    %277 = vector.broadcast %276 : vector<1x1xi1> to vector<5x32xi1>
    %278 = arith.select %277, %274, %275 : vector<5x32xi1>, vector<5x32xf32>
    %279 = vector.extract_strided_slice %11 {offsets = [24, 0], sizes = [4, 32], strides = [1, 1]} : vector<32x32xf32> to vector<4x32xf32>
    %280 = vector.extract_strided_slice %11 {offsets = [8, 0], sizes = [4, 32], strides = [1, 1]} : vector<32x32xf32> to vector<4x32xf32>
    %281 = vector.shape_cast %269 : vector<1x1xi1> to vector<1x1xi1>
    %282 = vector.broadcast %281 : vector<1x1xi1> to vector<4x32xi1>
    %283 = arith.select %282, %279, %280 : vector<4x32xi1>, vector<4x32xf32>
    %284 = tpu.iota {dimensions = array<i32: 0>} : vector<5x1xi32>
    %285 = vector.broadcast %0 : i32 to vector<5x1xi32>
    %286 = arith.cmpi eq, %284, %285 : vector<5x1xi32>
    %287 = arith.extui %286 : vector<5x1xi1> to vector<5x1xi32>
    %288 = arith.sitofp %287 : vector<5x1xi32> to vector<5x1xf32>
    %289 = arith.mulf %273, %288 : vector<5x1xf32>
    %cst_64 = arith.constant dense<0.000000e+00> : vector<1xf32>
    %290 = vector.multi_reduction <add>, %289, %cst_64 [0] : vector<5x1xf32> to vector<1xf32>
    %291 = vector.shape_cast %290 : vector<1xf32> to vector<1x1xf32>
    %292 = arith.subf %288, %273 : vector<5x1xf32>
    %293 = vector.broadcast %291 : vector<1x1xf32> to vector<5x1xf32>
    %294 = arith.mulf %293, %292 : vector<5x1xf32>
    %295 = vector.broadcast %294 : vector<5x1xf32> to vector<5x32xf32>
    %296 = arith.mulf %295, %278 : vector<5x32xf32>
    %cst_65 = arith.constant dense<0.000000e+00> : vector<32xf32>
    %297 = vector.multi_reduction <add>, %296, %cst_65 [0] : vector<5x32xf32> to vector<32xf32>
    %298 = vector.shape_cast %297 : vector<32xf32> to vector<1x32xf32>
    %299 = tpu.concatenate %298, %283 in 0 : vector<1x32xf32>, vector<4x32xf32> -> vector<5x32xf32>
    %300 = tpu.iota {dimensions = array<i32: 1>} : vector<5x32xi32>
    %c24_i32 = arith.constant 24 : i32
    %301 = vector.broadcast %c24_i32 : i32 to vector<5x32xi32>
    %302 = arith.cmpi slt, %300, %301 : vector<5x32xi32>
    %cst_66 = arith.constant 0.000000e+00 : f32
    %303 = vector.broadcast %cst_66 : f32 to vector<5x32xf32>
    %304 = arith.select %302, %299, %303 : vector<5x32xi1>, vector<5x32xf32>
    %cst_67 = arith.constant dense<0.000000e+00> : vector<5x128xf32>
    %305 = tpu.matmul %304, %10, %cst_67 {dimension_numbers = #tpu.dot_dimension_numbers<[1], [0], [0], [1], [0, 0, 1, 1], [], []>} : vector<5x32xf32>, vector<32x128xf32>, vector<5x128xf32> -> vector<5x128xf32>
    %306 = vector.broadcast %270 : vector<1x1xi32> to vector<1x128xi32>
    %307 = arith.cmpi eq, %12, %306 : vector<1x128xi32>
    %308 = arith.extui %307 : vector<1x128xi1> to vector<1x128xi32>
    %309 = arith.sitofp %308 : vector<1x128xi32> to vector<1x128xf32>
    %310 = vector.broadcast %309 : vector<1x128xf32> to vector<5x128xf32>
    %311 = arith.mulf %305, %310 : vector<5x128xf32>
    %cst_68 = arith.constant dense<0.000000e+00> : vector<5xf32>
    %312 = vector.multi_reduction <add>, %311, %cst_68 [1] : vector<5x128xf32> to vector<5xf32>
    %313 = vector.shape_cast %312 : vector<5xf32> to vector<5x1xf32>
    %cst_69 = arith.constant 0.000000e+00 : f32
    %314 = vector.broadcast %cst_69 : f32 to vector<5x1xf32>
    %315 = arith.maximumf %313, %314 : vector<5x1xf32>
    %cst_70 = arith.constant 1.1920929E-7 : f32
    %316 = vector.broadcast %cst_70 : f32 to vector<5x1xf32>
    %317 = arith.maximumf %315, %316 : vector<5x1xf32>
    %318 = tpu.reciprocal %317 {approx = true} : vector<5x1xf32> -> vector<5x1xf32>
    %319 = arith.mulf %315, %318 : vector<5x1xf32>
    %320 = tpu.iota {dimensions = array<i32: 1>} : vector<1x80xi32>
    %cst_71 = arith.constant 5.000000e-01 : f32
    %321 = vector.broadcast %cst_71 : f32 to vector<5x1xf32>
    %322 = arith.mulf %321, %319 : vector<5x1xf32>
    %323 = vector.broadcast %270 : vector<1x1xi32> to vector<1x80xi32>
    %324 = arith.cmpi eq, %320, %323 : vector<1x80xi32>
    %325 = arith.extui %324 : vector<1x80xi1> to vector<1x80xi32>
    %326 = arith.sitofp %325 : vector<1x80xi32> to vector<1x80xf32>
    %327 = vector.broadcast %322 : vector<5x1xf32> to vector<5x80xf32>
    %328 = vector.broadcast %326 : vector<1x80xf32> to vector<5x80xf32>
    %329 = arith.mulf %327, %328 : vector<5x80xf32>
    %c0_72 = arith.constant 0 : index
    %c0_73 = arith.constant 0 : index
    %330 = vector.load %arg5[%c0_72, %c0_73] : memref<80x1024xf32, #tpu.memory_space<vmem>>, vector<80x1024xf32>
    %cst_74 = arith.constant dense<0.000000e+00> : vector<5x1024xf32>
    %331 = tpu.matmul %329, %330, %cst_74 {dimension_numbers = #tpu.dot_dimension_numbers<[1], [0], [0], [1], [0, 0, 1, 1], [], []>} : vector<5x80xf32>, vector<80x1024xf32>, vector<5x1024xf32> -> vector<5x1024xf32>
    %cst_75 = arith.constant dense<0x7F800000> : vector<5xf32>
    %332 = vector.multi_reduction <minimumf>, %331, %cst_75 [1] : vector<5x1024xf32> to vector<5xf32>
    %333 = vector.shape_cast %332 : vector<5xf32> to vector<5x1xf32>
    %cst_76 = arith.constant dense<0xFF800000> : vector<5xf32>
    %334 = vector.multi_reduction <maximumf>, %331, %cst_76 [1] : vector<5x1024xf32> to vector<5xf32>
    %335 = vector.shape_cast %334 : vector<5xf32> to vector<5x1xf32>
    %336 = vector.broadcast %333 : vector<5x1xf32> to vector<5x1024xf32>
    %337 = arith.subf %331, %336 : vector<5x1024xf32>
    %338 = arith.subf %335, %333 : vector<5x1xf32>
    %cst_77 = arith.constant 1.1920929E-7 : f32
    %339 = vector.broadcast %cst_77 : f32 to vector<5x1xf32>
    %340 = arith.maximumf %338, %339 : vector<5x1xf32>
    %341 = tpu.reciprocal %340 {approx = true} : vector<5x1xf32> -> vector<5x1xf32>
    %342 = vector.broadcast %341 : vector<5x1xf32> to vector<5x1024xf32>
    %343 = arith.mulf %337, %342 : vector<5x1024xf32>
    %cst_78 = arith.constant dense<0xFF800000> : vector<1024xf32>
    %344 = vector.multi_reduction <maximumf>, %343, %cst_78 [0] : vector<5x1024xf32> to vector<1024xf32>
    %345 = vector.shape_cast %344 : vector<1024xf32> to vector<1x1024xf32>
    %c0_79 = arith.constant 0 : index
    %c0_80 = arith.constant 0 : index
    %346 = vector.load %arg6[%c0_79, %c0_80] : memref<1x1024xf32, #tpu.memory_space<vmem>>, vector<1x1024xf32>
    tpu.vector_store %arg6[%c0_79, %c0_80], %345 {strides = array<i32>} : memref<1x1024xf32, #tpu.memory_space<vmem>>, vector<1x1024xf32>,
    return
  }
}

</mosaic_0001>

<llo_original>
// kernel: ssd_odam_forward.1
$region0: #{ssd_odam_forward.1}
  #allocation0 [shape = 'u32[]', space=smem, size = 0x4, offset = 0x4, fixed_abs, tag = 'smem constant byte address 0x4 - core index']
  #allocation1 [shape = 'u32[72,128]{1,0:T(1,128)}', space=vmem, size = 0x9000, scoped, tag = 'internal scratch']
  #allocation2 [shape = 's32[1]{0:T(128)S(6)}', space=smem, size = 0x200, scoped, tag = 'scoped memory for ssd_odam_forward.1']
  %s0 = inlined_call_operand.<no memory space> [shape: s32[1], index: 0, kind: input, shape index: {}]
  %s1 = inlined_call_operand.vmem [shape: f32[6], index: 1, kind: input, shape index: {}]
  %s2 = inlined_call_operand.vmem [shape: f32[32,128], index: 2, kind: input, shape index: {}]
  %s3 = inlined_call_operand.vmem [shape: f32[32,32], index: 3, kind: input, shape index: {}]
  %s4 = inlined_call_operand.vmem [shape: f32[2,4,128], index: 4, kind: input, shape index: {}]
  %s5 = inlined_call_operand.vmem [shape: f32[80,1024], index: 5, kind: input, shape index: {}]
  %s6 = inlined_call_operand.vmem [shape: f32[1,1024], index: 6, kind: output, shape index: {}]
  %s7 = sld [smem:[#allocation0]]
  $region38: #{ssd_odam_forward.1} parent=0
    _
  %s9 = ssub.s32 1, %s7
  %s10 = scalar_select 0, %s9, %s7
  %11 = sst [smem:[#allocation2]] %s0
  $region1: #{ssd_odam_forward.1} parent=0
    #allocation3 [shape = 'u8[512]{0}', space=smem, size = 0x200, scoped, tag = 'input window, operand 1, single buffered']
    #allocation4 [shape = 's32[1]{0}', space=sflag, size = 0x4, scoped, tag = 'scoped memory for ssd_odam_forward.1']
    %12 = vsyncpa [#allocation4], 0
    // Predicated region
    $region2: #{ssd_odam_forward.1} parent=1 // pred_check
      _
    $region3: #{ssd_odam_forward.1} parent=1 // pred_check_branch
      %14 = sbr.rel (0) target = $region5
    $region4: #{ssd_odam_forward.1} parent=1 // pred_region
      _
    $region5: #{ssd_odam_forward.1} parent=1 // pred_fallthru
      _
    // Predicated region
    $region6: #{ssd_odam_forward.1} parent=1 // pred_check
      _
    $region7: #{ssd_odam_forward.1} parent=1 // pred_check_branch
      %16 = sbr.rel (0) target = $region9
    $region8: #{ssd_odam_forward.1} parent=1 // pred_region
      %18 = vsyncadd [#allocation4], 0
      %s20 = sshll.u32 %s1, 4
      %s21 = int_to_ptr.vmem [resolvable:$true] %s20
      %23 = dma.vmem_to_smem %s21, 16, [#allocation3], [#allocation4]
    $region9: #{ssd_odam_forward.1} parent=1 // pred_fallthru
      _
    // Predicated region
    $region10: #{ssd_odam_forward.1} parent=1 // pred_check
      _
    $region11: #{ssd_odam_forward.1} parent=1 // pred_check_branch
      %25 = sbr.rel (0) target = $region13
    $region12: #{ssd_odam_forward.1} parent=1 // pred_region
      _
    $region13: #{ssd_odam_forward.1} parent=1 // pred_fallthru
      _
    // Predicated region
    $region14: #{ssd_odam_forward.1} parent=1 // pred_check
      _
    $region15: #{ssd_odam_forward.1} parent=1 // pred_check_branch
      %27 = sbr.rel (0) target = $region17
    $region16: #{ssd_odam_forward.1} parent=1 // pred_region
      _
    $region17: #{ssd_odam_forward.1} parent=1 // pred_fallthru
      _
    // Predicated region
    $region18: #{ssd_odam_forward.1} parent=1 // pred_check
      _
    $region19: #{ssd_odam_forward.1} parent=1 // pred_check_branch
      %29 = sbr.rel (0) target = $region21
    $region20: #{ssd_odam_forward.1} parent=1 // pred_region
      _
    $region21: #{ssd_odam_forward.1} parent=1 // pred_fallthru
      _
    // Predicated region
    $region22: #{ssd_odam_forward.1} parent=1 // pred_check
      _
    $region23: #{ssd_odam_forward.1} parent=1 // pred_check_branch
      %31 = sbr.rel (0) target = $region25
    $region24: #{ssd_odam_forward.1} parent=1 // pred_region
      _
    $region25: #{ssd_odam_forward.1} parent=1 // pred_fallthru
      _
    // Predicated region
    $region26: #{ssd_odam_forward.1} parent=1 // pred_check
      _
    $region27: #{ssd_odam_forward.1} parent=1 // pred_check_branch
      %33 = sbr.rel (0) target = $region29
    $region28: #{ssd_odam_forward.1} parent=1 // pred_region
      %35 = dma.done [#allocation4], 16
    $region29: #{ssd_odam_forward.1} parent=1 // pred_fallthru
      _
    %36 = sfence
    %s37 = sld [smem:[#allocation2]]
    %s38 = sld [smem:[#allocation3]]
    %s39 = sld [smem:[#allocation3 + $0x1]]
    %s40 = sld [smem:[#allocation3 + $0x2]]
    %s41 = sld [smem:[#allocation3 + $0x3]]
    %s42 = sld [smem:[#allocation3 + $0x4]]
    %s43 = sld [smem:[#allocation3 + $0x5]]
    %s44 = ssub.f32 %s40, %s38
    %s45 = ssub.f32 %s41, %s39
    %s46 = smul.f32 %s44, %s45
    %v47 = vld [vmem:[%s2] sm:$0xff]
    %v48 = vld [vmem:[%s2 + $0x8] sm:$0xff]
    %v49 = vld [vmem:[%s2 + $0x10] sm:$0xff]
    %v50 = vld [vmem:[%s2 + $0x18] sm:$0xff]
    %v51 = vld [vmem:[%s3] sm:$0xff]
    %v52 = vld [vmem:[%s3 + $0x8] sm:$0xff]
    %v53 = vld [vmem:[%s3 + $0x10] sm:$0xff]
    %v54 = vld [vmem:[%s3 + $0x18] sm:$0xff]
    %v55 = vlaneseq
    %v56 = vand.u32 %v55, 127
    %v57 = vlaneseq
    %v58 = vshrl.u32 %v57, 7
    %vm59 = vcmp.lt.s32.totalorder %v56, 84
    %vm60 = vcmask 261120
    %v62 = vsel %vm60, %v51, 0
    %v65 = vsel %vm60, %v52, 0
    %v68 = vsel %vm60, %v53, 0
    %v71 = vsel %vm60, %v54, 0
    %73 = vmatpush.msra.mxu0 0.0
    %74 = vmatpush.msra.mxu0 0.0
    %75 = vmatpush.msra.mxu0 0.0
    %76 = vmatpush.msra.mxu0 0.0
    %77 = vmatpush.msra.mxu0 0.0
    %78 = vmatpush.msra.mxu0 0.0
    %79 = vmatpush.msra.mxu0 0.0
    %80 = vmatpush.msra.mxu0 0.0
    %81 = vmatpush.msra.mxu0 0.0
    %82 = vmatpush.msra.mxu0 0.0
    %83 = vmatpush.msra.mxu0 0.0
    %84 = vmatpush.msra.mxu0 0.0
    %85 = vmatpush.msra.mxu0 %v50
    %86 = vmatpush.msra.mxu0 %v49
    %87 = vmatpush.msra.mxu0 %v48
    %88 = vmatpush.msra.mxu0 %v47
    %89 = vmatmul.f32.gmra.mxu0 %v62
    %v90 = vpop.f32.mrf.mxu0
    %v91 = vadd.f32 0.0, %v90
    %92 = vmatmul.f32.gmra.mxu0 %v65
    %v93 = vpop.f32.mrf.mxu0
    %v94 = vadd.f32 0.0, %v93
    %95 = vmatmul.f32.gmra.mxu0 %v68
    %v96 = vpop.f32.mrf.mxu0
    %v97 = vadd.f32 0.0, %v96
    %98 = vmatmul.f32.gmra.mxu0 %v71
    %v99 = vpop.f32.mrf.mxu0
    %v100 = vadd.f32 0.0, %v99
    %101 = vdwg.mxu0
    %vm102 = vcmask 1044480
    %v103 = vsel %vm102, %v91, -inf
    %v104 = vrot.slane %v103, 4
    %v105 = vmax.f32 %v103, %v104
    %v106 = vrot.slane %v105, 2
    %v107 = vmax.f32 %v105, %v106
    %v108 = vrot.slane %v107, 1
    %v109 = vmax.f32 %v107, %v108
    %v110 = vsub.f32 %v91, %v109
    %v111 = vmul.f32 %v110, 1.442695
    %v112 = vpow.pop %v111
    %v113 = vsel %vm102, %v112, 0.0
    %v114 = vrot.slane %v113, 4
    %v115 = vadd.f32 %v113, %v114
    %v116 = vrot.slane %v115, 2
    %v117 = vadd.f32 %v115, %v116
    %v118 = vrot.slane %v117, 1
    %v119 = vadd.f32 %v117, %v118
    %v120 = vrcp.pop %v119
    %v121 = vmul.f32 %v119, %v120
    %v122 = vsub.f32 1.0, %v121
    %v123 = vmul.f32 %v120, %v122
    %v124 = vadd.f32 %v120, %v123
    %vm125 = vweird.f32 %v119
    %vm126 = vweird.f32 %v120
    %vm127 = vmor %vm125, %vm126
    %v128 = vsel %vm127, %v120, %v124
    %v129 = vand.u32 2147483647, %v119
    %vm130 = vcmp.eq.f32.partialorder %v129, 8.507059e+37
    %v131 = vand.u32 %v119, 2147483648
    %v132 = vor.u32 1.1754944e-38, %v131
    %v133 = vsel %vm130, %v132, %v128
    %v134 = vmul.f32 %v112, %v133
    %v135 = vstv %s37
    %vm136 = vcmp.eq.s32.totalorder %v58, %v135
    %v137 = vsel %vm136, %v134, 0.0
    %v138 = vsel %vm102, %v137, 0.0
    %v139 = vrot.slane %v138, 4
    %v140 = vadd.f32 %v138, %v139
    %v141 = vrot.slane %v140, 2
    %v142 = vadd.f32 %v140, %v141
    %v143 = vrot.slane %v142, 1
    %v144 = vadd.f32 %v142, %v143
    %v145 = vld [vmem:[%s4] sm:$0xf]
    %v147 = vrot.slane %v145, 2
    %v149 = vadd.f32 %v145, %v147
    %v150 = vmul.f32 %v149, 0.5
    %v151 = vrot.slane %v145, 6
    %v153 = vsub.f32 %v145, %v151
    %v154 = vmul.f32 %v94, 0.1
    %v156 = vrot.slane %v154, 6
    %v158 = vmul.f32 %v153, %v156
    %v160 = vrot.slane %v158, 2
    %v162 = vadd.f32 %v150, %v160
    %v163 = vmul.f32 %v94, 0.2
    %v164 = vmul.f32 %v163, 1.442695
    %v165 = vpow.pop %v164
    %v166 = vmul.f32 %v153, %v165
    %v167 = vmul.f32 %v166, 0.5
    %v169 = vrot.slane %v167, 2
    %v171 = vsub.f32 %v162, %v169
    %v172 = vmax.f32 %v171, 0.0
    %v173 = vstv %s43
    %v174 = vmin.f32 %v173, %v172
    %v175 = vstv %s42
    %v176 = vmin.f32 %v175, %v172
    %v177 = vadd.f32 %v162, %v169
    %v178 = vmax.f32 %v177, 0.0
    %v179 = vmin.f32 %v173, %v178
    %v180 = vmin.f32 %v175, %v178
    %v181 = vstv %s38
    %v182 = vmax.f32 %v174, %v181
    %v183 = vstv %s39
    %v184 = vmax.f32 %v176, %v183
    %v185 = vstv %s40
    %v186 = vmin.f32 %v179, %v185
    %v187 = vstv %s41
    %v188 = vmin.f32 %v180, %v187
    %v189 = vsub.f32 %v186, %v182
    %v190 = vmax.f32 %v189, 0.0
    %v191 = vsub.f32 %v188, %v184
    %v192 = vmax.f32 %v191, 0.0
    %v194 = vrot.slane %v192, 1
    %v196 = vmul.f32 %v190, %v194
    %v197 = vsub.f32 %v179, %v174
    %v198 = vsub.f32 %v180, %v176
    %v200 = vrot.slane %v198, 1
    %v202 = vmul.f32 %v197, %v200
    %v203 = vstv %s46
    %v204 = vadd.f32 %v202, %v203
    %v205 = vsub.f32 %v204, %v196
    %v206 = vmax.f32 %v205, 1.1920929e-07
    %v207 = vrcp.pop %v206
    %v208 = vmul.f32 %v206, %v207
    %v209 = vsub.f32 1.0, %v208
    %v210 = vmul.f32 %v207, %v209
    %v211 = vadd.f32 %v207, %v210
    %vm212 = vweird.f32 %v206
    %vm213 = vweird.f32 %v207
    %vm214 = vmor %vm212, %vm213
    %v215 = vsel %vm214, %v207, %v211
    %v216 = vand.u32 2147483647, %v206
    %vm217 = vcmp.eq.f32.partialorder %v216, 8.507059e+37
    %v218 = vand.u32 %v206, 2147483648
    %v219 = vor.u32 1.1754944e-38, %v218
    %v220 = vsel %vm217, %v219, %v215
    %v221 = vmul.f32 %v196, %v220
    %v222 = vmul.f32 %v221, %v144
    %v223 = vsel %vm59, %v222, -1.0
    %vm224 = vcmask 1040384
    %v225 = vsel %vm224, %v223, -inf
    %226 = vmax.xlane.f32.xlu0 %v225
    %v227 = vpop.xlane.xlu0 %226
    %vm228 = vcmp.ge.f32.partialorder %v223, %v227
    %v229 = vsel %vm228, %v56, 128
    %v230 = vsel %vm224, %v229, 2147483647
    %v231 = vand.u32 %v230, 65535
    %v232 = vshra.s32 %v230, 16
    %v233 = vcvt.s32.f32 %v231
    %v234 = vcvt.s32.f32 %v232
    %235 = vmin.xlane.f32.xlu0 %v234
    %v236 = vpop.xlane.xlu0 %235
    %vm237 = vcmp.eq.f32.partialorder %v234, %v236
    %v238 = vsel %vm237, %v233, inf
    %239 = vmin.xlane.f32.xlu0 %v238
    %v240 = vpop.xlane.xlu0 %239
    %v241 = vcvt.f32.s32 %v240
    %v242 = vcvt.f32.s32 %v236
    %v243 = vshll.u32 %v242, 16
    %v244 = vadd.s32 %v243, %v241
    %vm245 = vcmp.eq.s32.totalorder %v56, %v244
    %v246 = vsel %vm245, 1, 0
    %v247 = vperm.slane %v246, 0
    %vm248 = vcmp.eq.s32.totalorder %v247, 1
    %v249 = vsel %vm248, %v134, 0.0
    %v250 = vsel %vm102, %v249, 0.0
    %251 = vadd.xlane.f32.xlu0 %v250
    %v252 = vpop.xlane.xlu0 %251
    %v253 = vsel %vm102, %v97, -inf
    %v254 = vrot.slane %v253, 4
    %v255 = vmax.f32 %v253, %v254
    %v256 = vrot.slane %v255, 2
    %v257 = vmax.f32 %v255, %v256
    %v258 = vrot.slane %v257, 1
    %v259 = vmax.f32 %v257, %v258
    %v260 = vsub.f32 %v97, %v259
    %v261 = vmul.f32 %v260, 1.442695
    %v262 = vpow.pop %v261
    %v263 = vsel %vm102, %v262, 0.0
    %v264 = vrot.slane %v263, 4
    %v265 = vadd.f32 %v263, %v264
    %v266 = vrot.slane %v265, 2
    %v267 = vadd.f32 %v265, %v266
    %v268 = vrot.slane %v267, 1
    %v269 = vadd.f32 %v267, %v268
    %v270 = vrcp.pop %v269
    %v271 = vmul.f32 %v269, %v270
    %v272 = vsub.f32 1.0, %v271
    %v273 = vmul.f32 %v270, %v272
    %v274 = vadd.f32 %v270, %v273
    %vm275 = vweird.f32 %v269
    %vm276 = vweird.f32 %v270
    %vm277 = vmor %vm275, %vm276
    %v278 = vsel %vm277, %v270, %v274
    %v279 = vand.u32 2147483647, %v269
    %vm280 = vcmp.eq.f32.partialorder %v279, 8.507059e+37
    %v281 = vand.u32 %v269, 2147483648
    %v282 = vor.u32 1.1754944e-38, %v281
    %v283 = vsel %vm280, %v282, %v278
    %v284 = vmul.f32 %v262, %v283
    %v285 = vsel %vm136, %v284, 0.0
    %v286 = vsel %vm102, %v285, 0.0
    %v287 = vrot.slane %v286, 4
    %v288 = vadd.f32 %v286, %v287
    %v289 = vrot.slane %v288, 2
    %v290 = vadd.f32 %v288, %v289
    %v291 = vrot.slane %v290, 1
    %v292 = vadd.f32 %v290, %v291
    %s293 = scalar_lea.vmem %s4, 4
    %v294 = vld [vmem:[%s293] sm:$0xf]
    %v296 = vrot.slane %v294, 2
    %v298 = vadd.f32 %v294, %v296
    %v299 = vmul.f32 %v298, 0.5
    %v300 = vrot.slane %v294, 6
    %v302 = vsub.f32 %v294, %v300
    %v303 = vmul.f32 %v100, 0.1
    %v305 = vrot.slane %v303, 6
    %v307 = vmul.f32 %v302, %v305
    %v309 = vrot.slane %v307, 2
    %v311 = vadd.f32 %v299, %v309
    %v312 = vmul.f32 %v100, 0.2
    %v313 = vmul.f32 %v312, 1.442695
    %v314 = vpow.pop %v313
    %v315 = vmul.f32 %v302, %v314
    %v316 = vmul.f32 %v315, 0.5
    %v318 = vrot.slane %v316, 2
    %v320 = vsub.f32 %v311, %v318
    %v321 = vmax.f32 %v320, 0.0
    %v322 = vmin.f32 %v173, %v321
    %v323 = vmin.f32 %v175, %v321
    %v324 = vadd.f32 %v311, %v318
    %v325 = vmax.f32 %v324, 0.0
    %v326 = vmin.f32 %v173, %v325
    %v327 = vmin.f32 %v175, %v325
    %v328 = vmax.f32 %v322, %v181
    %v329 = vmax.f32 %v323, %v183
    %v330 = vmin.f32 %v326, %v185
    %v331 = vmin.f32 %v327, %v187
    %v332 = vsub.f32 %v330, %v328
    %v333 = vmax.f32 %v332, 0.0
    %v334 = vsub.f32 %v331, %v329
    %v335 = vmax.f32 %v334, 0.0
    %v337 = vrot.slane %v335, 1
    %v339 = vmul.f32 %v333, %v337
    %v340 = vsub.f32 %v326, %v322
    %v341 = vsub.f32 %v327, %v323
    %v343 = vrot.slane %v341, 1
    %v345 = vmul.f32 %v340, %v343
    %v346 = vadd.f32 %v345, %v203
    %v347 = vsub.f32 %v346, %v339
    %v348 = vmax.f32 %v347, 1.1920929e-07
    %v349 = vrcp.pop %v348
    %v350 = vmul.f32 %v348, %v349
    %v351 = vsub.f32 1.0, %v350
    %v352 = vmul.f32 %v349, %v351
    %v353 = vadd.f32 %v349, %v352
    %vm354 = vweird.f32 %v348
    %vm355 = vweird.f32 %v349
    %vm356 = vmor %vm354, %vm355
    %v357 = vsel %vm356, %v349, %v353
    %v358 = vand.u32 2147483647, %v348
    %vm359 = vcmp.eq.f32.partialorder %v358, 8.507059e+37
    %v360 = vand.u32 %v348, 2147483648
    %v361 = vor.u32 1.1754944e-38, %v360
    %v362 = vsel %vm359, %v361, %v357
    %v363 = vmul.f32 %v339, %v362
    %v364 = vmul.f32 %v363, %v292
    %v365 = vsel %vm59, %v364, -1.0
    %v366 = vsel %vm224, %v365, -inf
    %367 = vmax.xlane.f32.xlu0 %v366
    %v368 = vpop.xlane.xlu0 %367
    %vm369 = vcmp.ge.f32.partialorder %v365, %v368
    %v370 = vsel %vm369, %v56, 128
    %v371 = vsel %vm224, %v370, 2147483647
    %v372 = vand.u32 %v371, 65535
    %v373 = vshra.s32 %v371, 16
    %v374 = vcvt.s32.f32 %v372
    %v375 = vcvt.s32.f32 %v373
    %376 = vmin.xlane.f32.xlu0 %v375
    %v377 = vpop.xlane.xlu0 %376
    %vm378 = vcmp.eq.f32.partialorder %v375, %v377
    %v379 = vsel %vm378, %v374, inf
    %380 = vmin.xlane.f32.xlu0 %v379
    %v381 = vpop.xlane.xlu0 %380
    %v382 = vcvt.f32.s32 %v381
    %v383 = vcvt.f32.s32 %v377
    %v384 = vshll.u32 %v383, 16
    %v385 = vadd.s32 %v384, %v382
    %vm386 = vcmp.eq.s32.totalorder %v56, %v385
    %v387 = vsel %vm386, 1, 0
    %v388 = vperm.slane %v387, 0
    %vm389 = vcmp.eq.s32.totalorder %v388, 1
    %v390 = vsel %vm389, %v284, 0.0
    %v391 = vsel %vm102, %v390, 0.0
    %392 = vadd.xlane.f32.xlu0 %v391
    %v393 = vpop.xlane.xlu0 %392
    %vm394 = vcmp.gt.f32.partialorder %v368, %v227
    %v395 = vsel %vm394, %v385, %v244
    %v396 = vsel %vm394, 1, 0
    %v397 = vperm.slane %v396, 0
    %vm398 = vcmp.eq.s32.totalorder %v397, 1
    %v399 = vsel %vm398, %v393, %v252
    %v400 = vsel %vm398, %v53, %v51
    %v401 = vsel %vm398, %v54, %v52
    %v402 = vsel %vm136, 1, 0
    %v403 = vcvt.s32.f32 %v402
    %v404 = vmul.f32 %v399, %v403
    %v405 = vsel %vm102, %v404, 0.0
    %v406 = vrot.slane %v405, 4
    %v407 = vadd.f32 %v405, %v406
    %v408 = vrot.slane %v407, 2
    %v409 = vadd.f32 %v407, %v408
    %v410 = vrot.slane %v409, 1
    %v411 = vadd.f32 %v409, %v410
    %v412 = vsub.f32 %v403, %v399
    %v413 = vmul.f32 %v411, %v412
    %v414 = vmul.f32 %v413, %v400
    %vm415 = vcmask 258048
    %v416 = vsel %vm415, %v414, 0.0
    %v417 = vrot.slane %v416, 4
    %v418 = vadd.f32 %v416, %v417
    %v419 = vrot.slane %v418, 2
    %v420 = vadd.f32 %v418, %v419
    %v421 = vrot.slane %v420, 1
    %v422 = vadd.f32 %v420, %v421
    %v424 = vrot.slane %v401, 7
    %v426 = vsel %vm224, %v422, %v424
    %vm427 = vcmp.lt.s32.totalorder %v56, 24
    %v428 = vsel %vm427, %v426, 0.0
    %v430 = vsel %vm60, %v428, 0
    %432 = vmatpush.msra.mxu0 0.0
    %433 = vmatpush.msra.mxu0 0.0
    %434 = vmatpush.msra.mxu0 0.0
    %435 = vmatpush.msra.mxu0 0.0
    %436 = vmatpush.msra.mxu0 0.0
    %437 = vmatpush.msra.mxu0 0.0
    %438 = vmatpush.msra.mxu0 0.0
    %439 = vmatpush.msra.mxu0 0.0
    %440 = vmatpush.msra.mxu0 0.0
    %441 = vmatpush.msra.mxu0 0.0
    %442 = vmatpush.msra.mxu0 0.0
    %443 = vmatpush.msra.mxu0 0.0
    %444 = vmatpush.msra.mxu0 %v50
    %445 = vmatpush.msra.mxu0 %v49
    %446 = vmatpush.msra.mxu0 %v48
    %447 = vmatpush.msra.mxu0 %v47
    %448 = vmatmul.f32.gmra.mxu0 %v430
    %v449 = vpop.f32.mrf.mxu0
    %v450 = vadd.f32 0.0, %v449
    %451 = vdwg.mxu0
    %vm452 = vcmp.eq.s32.totalorder %v56, %v395
    %v453 = vsel %vm452, 1, 0
    %v454 = vcvt.s32.f32 %v453
    %v455 = vperm.slane %v454, 0
    %v456 = vmul.f32 %v450, %v455
    %v457 = vsel %vm102, %v456, 0.0
    %458 = vadd.xlane.f32.xlu0 %v457
    %v459 = vpop.xlane.xlu0 %458
    %v460 = vmax.f32 %v459, 0.0
    %v461 = vmax.f32 %v460, 1.1920929e-07
    %v462 = vrcp.pop %v461
    %v463 = vmul.f32 %v460, %v462
    %v464 = vmul.f32 %v463, 0.5
    %v465 = vmul.f32 %v464, %v455
    %v466 = vld [vmem:[%s5] sm:$0xff]
    %v467 = vld [vmem:[%s5 + $0x8] sm:$0xff]
    %v468 = vld [vmem:[%s5 + $0x10] sm:$0xff]
    %v469 = vld [vmem:[%s5 + $0x18] sm:$0xff]
    %v470 = vld [vmem:[%s5 + $0x20] sm:$0xff]
    %v471 = vld [vmem:[%s5 + $0x28] sm:$0xff]
    %v472 = vld [vmem:[%s5 + $0x30] sm:$0xff]
    %v473 = vld [vmem:[%s5 + $0x38] sm:$0xff]
    %v474 = vld [vmem:[%s5 + $0x40] sm:$0xff]
    %v475 = vld [vmem:[%s5 + $0x48] sm:$0xff]
    %v476 = vld [vmem:[%s5 + $0x50] sm:$0xff]
    %v477 = vld [vmem:[%s5 + $0x58] sm:$0xff]
    %v478 = vld [vmem:[%s5 + $0x60] sm:$0xff]
    %v479 = vld [vmem:[%s5 + $0x68] sm:$0xff]
    %v480 = vld [vmem:[%s5 + $0x70] sm:$0xff]
    %v481 = vld [vmem:[%s5 + $0x78] sm:$0xff]
    %v482 = vld [vmem:[%s5 + $0x80] sm:$0xff]
    %v483 = vld [vmem:[%s5 + $0x88] sm:$0xff]
    %v484 = vld [vmem:[%s5 + $0x90] sm:$0xff]
    %v485 = vld [vmem:[%s5 + $0x98] sm:$0xff]
    %v486 = vld [vmem:[%s5 + $0xa0] sm:$0xff]
    %v487 = vld [vmem:[%s5 + $0xa8] sm:$0xff]
    %v488 = vld [vmem:[%s5 + $0xb0] sm:$0xff]
    %v489 = vld [vmem:[%s5 + $0xb8] sm:$0xff]
    %v490 = vld [vmem:[%s5 + $0xc0] sm:$0xff]
    %v491 = vld [vmem:[%s5 + $0xc8] sm:$0xff]
    %v492 = vld [vmem:[%s5 + $0xd0] sm:$0xff]
    %v493 = vld [vmem:[%s5 + $0xd8] sm:$0xff]
    %v494 = vld [vmem:[%s5 + $0xe0] sm:$0xff]
    %v495 = vld [vmem:[%s5 + $0xe8] sm:$0xff]
    %v496 = vld [vmem:[%s5 + $0xf0] sm:$0xff]
    %v497 = vld [vmem:[%s5 + $0xf8] sm:$0xff]
    %v498 = vld [vmem:[%s5 + $0x100] sm:$0xff]
    %v499 = vld [vmem:[%s5 + $0x108] sm:$0xff]
    %v500 = vld [vmem:[%s5 + $0x110] sm:$0xff]
    %v501 = vld [vmem:[%s5 + $0x118] sm:$0xff]
    %v502 = vld [vmem:[%s5 + $0x120] sm:$0xff]
    %v503 = vld [vmem:[%s5 + $0x128] sm:$0xff]
    %v504 = vld [vmem:[%s5 + $0x130] sm:$0xff]
    %v505 = vld [vmem:[%s5 + $0x138] sm:$0xff]
    %v506 = vld [vmem:[%s5 + $0x140] sm:$0xff]
    %v507 = vld [vmem:[%s5 + $0x148] sm:$0xff]
    %v508 = vld [vmem:[%s5 + $0x150] sm:$0xff]
    %v509 = vld [vmem:[%s5 + $0x158] sm:$0xff]
    %v510 = vld [vmem:[%s5 + $0x160] sm:$0xff]
    %v511 = vld [vmem:[%s5 + $0x168] sm:$0xff]
    %v512 = vld [vmem:[%s5 + $0x170] sm:$0xff]
    %v513 = vld [vmem:[%s5 + $0x178] sm:$0xff]
    %v514 = vld [vmem:[%s5 + $0x180] sm:$0xff]
    %v515 = vld [vmem:[%s5 + $0x188] sm:$0xff]
    %v516 = vld [vmem:[%s5 + $0x190] sm:$0xff]
    %v517 = vld [vmem:[%s5 + $0x198] sm:$0xff]
    %v518 = vld [vmem:[%s5 + $0x1a0] sm:$0xff]
    %v519 = vld [vmem:[%s5 + $0x1a8] sm:$0xff]
    %v520 = vld [vmem:[%s5 + $0x1b0] sm:$0xff]
    %v521 = vld [vmem:[%s5 + $0x1b8] sm:$0xff]
    %v522 = vld [vmem:[%s5 + $0x1c0] sm:$0xff]
    %v523 = vld [vmem:[%s5 + $0x1c8] sm:$0xff]
    %v524 = vld [vmem:[%s5 + $0x1d0] sm:$0xff]
    %v525 = vld [vmem:[%s5 + $0x1d8] sm:$0xff]
    %v526 = vld [vmem:[%s5 + $0x1e0] sm:$0xff]
    %v527 = vld [vmem:[%s5 + $0x1e8] sm:$0xff]
    %v528 = vld [vmem:[%s5 + $0x1f0] sm:$0xff]
    %v529 = vld [vmem:[%s5 + $0x1f8] sm:$0xff]
    %v530 = vld [vmem:[%s5 + $0x200] sm:$0xff]
    %v531 = vld [vmem:[%s5 + $0x208] sm:$0xff]
    %v532 = vld [vmem:[%s5 + $0x210] sm:$0xff]
    %v533 = vld [vmem:[%s5 + $0x218] sm:$0xff]
    %v534 = vld [vmem:[%s5 + $0x220] sm:$0xff]
    %v535 = vld [vmem:[%s5 + $0x228] sm:$0xff]
    %v536 = vld [vmem:[%s5 + $0x230] sm:$0xff]
    %v537 = vld [vmem:[%s5 + $0x238] sm:$0xff]
    %v538 = vld [vmem:[%s5 + $0x240] sm:$0xff]
    %v539 = vld [vmem:[%s5 + $0x248] sm:$0xff]
    %v540 = vld [vmem:[%s5 + $0x250] sm:$0xff]
    %v541 = vld [vmem:[%s5 + $0x258] sm:$0xff]
    %v542 = vld [vmem:[%s5 + $0x260] sm:$0xff]
    %v543 = vld [vmem:[%s5 + $0x268] sm:$0xff]
    %v544 = vld [vmem:[%s5 + $0x270] sm:$0xff]
    %v545 = vld [vmem:[%s5 + $0x278] sm:$0xff]
    %vm546 = vcmask 654336
    %v548 = vsel %vm546, %v465, 0
    %550 = vmatpush.msra.mxu0 0.0
    %551 = vmatpush.msra.mxu0 0.0
    %552 = vmatpush.msra.mxu0 0.0
    %553 = vmatpush.msra.mxu0 0.0
    %554 = vmatpush.msra.mxu0 0.0
    %555 = vmatpush.msra.mxu0 0.0
    %556 = vmatpush.msra.mxu0 %v538
    %557 = vmatpush.msra.mxu0 %v530
    %558 = vmatpush.msra.mxu0 %v522
    %559 = vmatpush.msra.mxu0 %v514
    %560 = vmatpush.msra.mxu0 %v506
    %561 = vmatpush.msra.mxu0 %v498
    %562 = vmatpush.msra.mxu0 %v490
    %563 = vmatpush.msra.mxu0 %v482
    %564 = vmatpush.msra.mxu0 %v474
    %565 = vmatpush.msra.mxu0 %v466
    %566 = vmatmul.f32.gmra.mxu0 %v548
    %v567 = vpop.f32.mrf.mxu0
    %v568 = vadd.f32 0.0, %v567
    %569 = vdwg.mxu0
    %570 = vmatpush.msra.mxu0 0.0
    %571 = vmatpush.msra.mxu0 0.0
    %572 = vmatpush.msra.mxu0 0.0
    %573 = vmatpush.msra.mxu0 0.0
    %574 = vmatpush.msra.mxu0 0.0
    %575 = vmatpush.msra.mxu0 0.0
    %576 = vmatpush.msra.mxu0 %v539
    %577 = vmatpush.msra.mxu0 %v531
    %578 = vmatpush.msra.mxu0 %v523
    %579 = vmatpush.msra.mxu0 %v515
    %580 = vmatpush.msra.mxu0 %v507
    %581 = vmatpush.msra.mxu0 %v499
    %582 = vmatpush.msra.mxu0 %v491
    %583 = vmatpush.msra.mxu0 %v483
    %584 = vmatpush.msra.mxu0 %v475
    %585 = vmatpush.msra.mxu0 %v467
    %586 = vmatmul.f32.gmra.mxu0 %v548
    %v587 = vpop.f32.mrf.mxu0
    %v588 = vadd.f32 0.0, %v587
    %589 = vdwg.mxu0
    %590 = vmatpush.msra.mxu0 0.0
    %591 = vmatpush.msra.mxu0 0.0
    %592 = vmatpush.msra.mxu0 0.0
    %593 = vmatpush.msra.mxu0 0.0
    %594 = vmatpush.msra.mxu0 0.0
    %595 = vmatpush.msra.mxu0 0.0
    %596 = vmatpush.msra.mxu0 %v540
    %597 = vmatpush.msra.mxu0 %v532
    %598 = vmatpush.msra.mxu0 %v524
    %599 = vmatpush.msra.mxu0 %v516
    %600 = vmatpush.msra.mxu0 %v508
    %601 = vmatpush.msra.mxu0 %v500
    %602 = vmatpush.msra.mxu0 %v492
    %603 = vmatpush.msra.mxu0 %v484
    %604 = vmatpush.msra.mxu0 %v476
    %605 = vmatpush.msra.mxu0 %v468
    %606 = vmatmul.f32.gmra.mxu0 %v548
    %v607 = vpop.f32.mrf.mxu0
    %v608 = vadd.f32 0.0, %v607
    %609 = vdwg.mxu0
    %610 = vmatpush.msra.mxu0 0.0
    %611 = vmatpush.msra.mxu0 0.0
    %612 = vmatpush.msra.mxu0 0.0
    %613 = vmatpush.msra.mxu0 0.0
    %614 = vmatpush.msra.mxu0 0.0
    %615 = vmatpush.msra.mxu0 0.0
    %616 = vmatpush.msra.mxu0 %v541
    %617 = vmatpush.msra.mxu0 %v533
    %618 = vmatpush.msra.mxu0 %v525
    %619 = vmatpush.msra.mxu0 %v517
    %620 = vmatpush.msra.mxu0 %v509
    %621 = vmatpush.msra.mxu0 %v501
    %622 = vmatpush.msra.mxu0 %v493
    %623 = vmatpush.msra.mxu0 %v485
    %624 = vmatpush.msra.mxu0 %v477
    %625 = vmatpush.msra.mxu0 %v469
    %626 = vmatmul.f32.gmra.mxu0 %v548
    %v627 = vpop.f32.mrf.mxu0
    %v628 = vadd.f32 0.0, %v627
    %629 = vdwg.mxu0
    %630 = vmatpush.msra.mxu0 0.0
    %631 = vmatpush.msra.mxu0 0.0
    %632 = vmatpush.msra.mxu0 0.0
    %633 = vmatpush.msra.mxu0 0.0
    %634 = vmatpush.msra.mxu0 0.0
    %635 = vmatpush.msra.mxu0 0.0
    %636 = vmatpush.msra.mxu0 %v542
    %637 = vmatpush.msra.mxu0 %v534
    %638 = vmatpush.msra.mxu0 %v526
    %639 = vmatpush.msra.mxu0 %v518
    %640 = vmatpush.msra.mxu0 %v510
    %641 = vmatpush.msra.mxu0 %v502
    %642 = vmatpush.msra.mxu0 %v494
    %643 = vmatpush.msra.mxu0 %v486
    %644 = vmatpush.msra.mxu0 %v478
    %645 = vmatpush.msra.mxu0 %v470
    %646 = vmatmul.f32.gmra.mxu0 %v548
    %v647 = vpop.f32.mrf.mxu0
    %v648 = vadd.f32 0.0, %v647
    %649 = vdwg.mxu0
    %650 = vmatpush.msra.mxu0 0.0
    %651 = vmatpush.msra.mxu0 0.0
    %652 = vmatpush.msra.mxu0 0.0
    %653 = vmatpush.msra.mxu0 0.0
    %654 = vmatpush.msra.mxu0 0.0
    %655 = vmatpush.msra.mxu0 0.0
    %656 = vmatpush.msra.mxu0 %v543
    %657 = vmatpush.msra.mxu0 %v535
    %658 = vmatpush.msra.mxu0 %v527
    %659 = vmatpush.msra.mxu0 %v519
    %660 = vmatpush.msra.mxu0 %v511
    %661 = vmatpush.msra.mxu0 %v503
    %662 = vmatpush.msra.mxu0 %v495
    %663 = vmatpush.msra.mxu0 %v487
    %664 = vmatpush.msra.mxu0 %v479
    %665 = vmatpush.msra.mxu0 %v471
    %666 = vmatmul.f32.gmra.mxu0 %v548
    %v667 = vpop.f32.mrf.mxu0
    %v668 = vadd.f32 0.0, %v667
    %669 = vdwg.mxu0
    %670 = vmatpush.msra.mxu0 0.0
    %671 = vmatpush.msra.mxu0 0.0
    %672 = vmatpush.msra.mxu0 0.0
    %673 = vmatpush.msra.mxu0 0.0
    %674 = vmatpush.msra.mxu0 0.0
    %675 = vmatpush.msra.mxu0 0.0
    %676 = vmatpush.msra.mxu0 %v544
    %677 = vmatpush.msra.mxu0 %v536
    %678 = vmatpush.msra.mxu0 %v528
    %679 = vmatpush.msra.mxu0 %v520
    %680 = vmatpush.msra.mxu0 %v512
    %681 = vmatpush.msra.mxu0 %v504
    %682 = vmatpush.msra.mxu0 %v496
    %683 = vmatpush.msra.mxu0 %v488
    %684 = vmatpush.msra.mxu0 %v480
    %685 = vmatpush.msra.mxu0 %v472
    %686 = vmatmul.f32.gmra.mxu0 %v548
    %v687 = vpop.f32.mrf.mxu0
    %v688 = vadd.f32 0.0, %v687
    %689 = vdwg.mxu0
    %690 = vmatpush.msra.mxu0 0.0
    %691 = vmatpush.msra.mxu0 0.0
    %692 = vmatpush.msra.mxu0 0.0
    %693 = vmatpush.msra.mxu0 0.0
    %694 = vmatpush.msra.mxu0 0.0
    %695 = vmatpush.msra.mxu0 0.0
    %696 = vmatpush.msra.mxu0 %v545
    %697 = vmatpush.msra.mxu0 %v537
    %698 = vmatpush.msra.mxu0 %v529
    %699 = vmatpush.msra.mxu0 %v521
    %700 = vmatpush.msra.mxu0 %v513
    %701 = vmatpush.msra.mxu0 %v505
    %702 = vmatpush.msra.mxu0 %v497
    %703 = vmatpush.msra.mxu0 %v489
    %704 = vmatpush.msra.mxu0 %v481
    %705 = vmatpush.msra.mxu0 %v473
    %706 = vmatmul.f32.gmra.mxu0 %v548
    %v707 = vpop.f32.mrf.mxu0
    %v708 = vadd.f32 0.0, %v707
    %709 = vdwg.mxu0
    %v710 = vsel %vm102, %v568, inf
    %v711 = vsel %vm102, %v588, inf
    %v712 = vsel %vm102, %v608, inf
    %v713 = vsel %vm102, %v628, inf
    %v714 = vsel %vm102, %v648, inf
    %v715 = vmin.f32 %v710, %v714
    %v716 = vsel %vm102, %v668, inf
    %v717 = vmin.f32 %v711, %v716
    %v718 = vsel %vm102, %v688, inf
    %v719 = vmin.f32 %v712, %v718
    %v720 = vsel %vm102, %v708, inf
    %v721 = vmin.f32 %v713, %v720
    %v722 = vmin.f32 %v715, %v717
    %v723 = vmin.f32 %v719, %v721
    %v724 = vmin.f32 %v722, %v723
    %725 = vmin.xlane.f32.xlu0 %v724
    %v726 = vpop.xlane.xlu0 %725
    %v727 = vsel %vm102, %v568, -inf
    %v728 = vsel %vm102, %v588, -inf
    %v729 = vsel %vm102, %v608, -inf
    %v730 = vsel %vm102, %v628, -inf
    %v731 = vsel %vm102, %v648, -inf
    %v732 = vmax.f32 %v727, %v731
    %v733 = vsel %vm102, %v668, -inf
    %v734 = vmax.f32 %v728, %v733
    %v735 = vsel %vm102, %v688, -inf
    %v736 = vmax.f32 %v729, %v735
    %v737 = vsel %vm102, %v708, -inf
    %v738 = vmax.f32 %v730, %v737
    %v739 = vmax.f32 %v732, %v734
    %v740 = vmax.f32 %v736, %v738
    %v741 = vmax.f32 %v739, %v740
    %742 = vmax.xlane.f32.xlu0 %v741
    %v743 = vpop.xlane.xlu0 %742
    %v744 = vsub.f32 %v568, %v726
    %v745 = vsub.f32 %v588, %v726
    %v746 = vsub.f32 %v608, %v726
    %v747 = vsub.f32 %v628, %v726
    %v748 = vsub.f32 %v648, %v726
    %v749 = vsub.f32 %v668, %v726
    %v750 = vsub.f32 %v688, %v726
    %v751 = vsub.f32 %v708, %v726
    %v752 = vsub.f32 %v743, %v726
    %v753 = vmax.f32 %v752, 1.1920929e-07
    %v754 = vrcp.pop %v753
    %v755 = vmul.f32 %v744, %v754
    %v756 = vmul.f32 %v745, %v754
    %v757 = vmul.f32 %v746, %v754
    %v758 = vmul.f32 %v747, %v754
    %v759 = vmul.f32 %v748, %v754
    %v760 = vmul.f32 %v749, %v754
    %v761 = vmul.f32 %v750, %v754
    %v762 = vmul.f32 %v751, %v754
    %v763 = vsel %vm102, %v755, -inf
    %v764 = vrot.slane %v763, 4
    %v765 = vmax.f32 %v763, %v764
    %v766 = vrot.slane %v765, 2
    %v767 = vmax.f32 %v765, %v766
    %v768 = vrot.slane %v767, 1
    %v769 = vmax.f32 %v767, %v768
    %v770 = vsel %vm102, %v756, -inf
    %v771 = vrot.slane %v770, 4
    %v772 = vmax.f32 %v770, %v771
    %v773 = vrot.slane %v772, 2
    %v774 = vmax.f32 %v772, %v773
    %v775 = vrot.slane %v774, 1
    %v776 = vmax.f32 %v774, %v775
    %v777 = vsel %vm102, %v757, -inf
    %v778 = vrot.slane %v777, 4
    %v779 = vmax.f32 %v777, %v778
    %v780 = vrot.slane %v779, 2
    %v781 = vmax.f32 %v779, %v780
    %v782 = vrot.slane %v781, 1
    %v783 = vmax.f32 %v781, %v782
    %v784 = vsel %vm102, %v758, -inf
    %v785 = vrot.slane %v784, 4
    %v786 = vmax.f32 %v784, %v785
    %v787 = vrot.slane %v786, 2
    %v788 = vmax.f32 %v786, %v787
    %v789 = vrot.slane %v788, 1
    %v790 = vmax.f32 %v788, %v789
    %v791 = vsel %vm102, %v759, -inf
    %v792 = vrot.slane %v791, 4
    %v793 = vmax.f32 %v791, %v792
    %v794 = vrot.slane %v793, 2
    %v795 = vmax.f32 %v793, %v794
    %v796 = vrot.slane %v795, 1
    %v797 = vmax.f32 %v795, %v796
    %v798 = vsel %vm102, %v760, -inf
    %v799 = vrot.slane %v798, 4
    %v800 = vmax.f32 %v798, %v799
    %v801 = vrot.slane %v800, 2
    %v802 = vmax.f32 %v800, %v801
    %v803 = vrot.slane %v802, 1
    %v804 = vmax.f32 %v802, %v803
    %v805 = vsel %vm102, %v761, -inf
    %v806 = vrot.slane %v805, 4
    %v807 = vmax.f32 %v805, %v806
    %v808 = vrot.slane %v807, 2
    %v809 = vmax.f32 %v807, %v808
    %v810 = vrot.slane %v809, 1
    %v811 = vmax.f32 %v809, %v810
    %v812 = vsel %vm102, %v762, -inf
    %v813 = vrot.slane %v812, 4
    %v814 = vmax.f32 %v812, %v813
    %v815 = vrot.slane %v814, 2
    %v816 = vmax.f32 %v814, %v815
    %v817 = vrot.slane %v816, 1
    %v818 = vmax.f32 %v816, %v817
    %v827 = vrot.slane %v776, 7
    %v828 = vrot.slane %v783, 6
    %v829 = vrot.slane %v790, 5
    %v830 = vrot.slane %v797, 4
    %v831 = vrot.slane %v804, 3
    %v832 = vrot.slane %v811, 2
    %v833 = vrot.slane %v818, 1
    %v834 = vsel %vm224, %v769, %v827
    %vm835 = vcmask 1042434
    %v836 = vsel %vm835, %v828, %v829
    %vm837 = vcmask 1041408
    %v838 = vsel %vm837, %v834, %v836
    %vm839 = vcmask 1044484
    %v840 = vsel %vm839, %v830, %v831
    %vm841 = vcmask 1046534
    %v842 = vsel %vm841, %v832, %v833
    %vm843 = vcmask 1045508
    %v844 = vsel %vm843, %v840, %v842
    %vm845 = vcmask 1043456
    %v846 = vsel %vm845, %v838, %v844
    %848 = vst [vmem:[%s6] sm:$0xff] %v846
    // Predicated region
    $region30: #{ssd_odam_forward.1} parent=1 // pred_check
      _
    $region31: #{ssd_odam_forward.1} parent=1 // pred_check_branch
      %850 = sbr.rel (0) target = $region33
    $region32: #{ssd_odam_forward.1} parent=1 // pred_region
      _
    $region33: #{ssd_odam_forward.1} parent=1 // pred_fallthru
      _
    // Predicated region
    $region34: #{ssd_odam_forward.1} parent=1 // pred_check
      _
    $region35: #{ssd_odam_forward.1} parent=1 // pred_check_branch
      %852 = sbr.rel (0) target = $region37
    $region36: #{ssd_odam_forward.1} parent=1 // pred_region
      _
    $region37: #{ssd_odam_forward.1} parent=1 // pred_fallthru
      _
    %853 = vsyncpa [#allocation4], 1

</llo_original>
